<compile_context>
chip_gen: v7x
topology: tpu7x:2x2x1
jax: 0.10.0
libtpu: 0.0.40
codegen_flags: <defaults>
</compile_context>

<pallas_src>
import functools

import jax
import jax.numpy as jnp
from jax.experimental import pallas as pl
from jax.experimental.pallas import tpu as pltpu

BN_EPS = 1e-5

B = 8            # batch
INPUT_DIM = 32   # input_dim
H = 128          # hidden_size (PyTorch default)
NUM_BLOCKS = 3   # num_blocks (PyTorch default)

# slab row layout (f32, [8, H]):
#   row 0      : b1
#   rows 1..3  : bb[0..2]  (block-B biases)
#   row 4      : w2 (as a 128-lane vector)
#   row 5, col0: b2
#   rows 6..7  : zero padding (sublane multiple of 8)


def model_kernel(x_ref, w1_ref, wa_ref, wb_ref, ba_ref, slab_ref, out_ref,
                 *, num_blocks):
    b1 = slab_ref[0:1, :]                                      # [1, H] f32

    # fc1 (bf16 x bf16 MXU, f32 accumulate)
    h = jnp.dot(x_ref[...].astype(jnp.bfloat16), w1_ref[...],
                preferred_element_type=jnp.float32) + b1       # [B, H] f32

    # residual blocks: x + Linear2(Dropout(ReLU(Linear1(BN(x)))))
    # BN is pre-folded into wa/ba; Dropout(p) is the identity in eval().
    for blk in range(num_blocks):
        a = jnp.dot(h.astype(jnp.bfloat16), wa_ref[blk],
                    preferred_element_type=jnp.float32) + ba_ref[blk:blk + 1, :]
        a = jnp.maximum(a, 0.0)                                # ReLU
        h = h + (jnp.dot(a.astype(jnp.bfloat16), wb_ref[blk],
                         preferred_element_type=jnp.float32)
                 + slab_ref[1 + blk:2 + blk, :])

    # fc2 (N=1) as VPU multiply + lane reduction, then sigmoid on the EUP.
    w2 = slab_ref[4:5, :]                                      # [1, H]
    b2 = slab_ref[5:6, 0:1]                                    # [1, 1]
    logits = jnp.sum(h * w2, axis=-1, keepdims=True) + b2      # [B, 1]
    out_ref[...] = jax.nn.sigmoid(logits)


def model_forward(x, kp):
    args = (x, kp["w1"], kp["wa"], kp["wb"], kp["ba"], kp["slab"])
    vmem = lambda: pl.BlockSpec(memory_space=pltpu.MemorySpace.VMEM)

    flops = 2 * B * INPUT_DIM * H + NUM_BLOCKS * 16 * B * H * H + 2 * B * H
    bytes_accessed = sum(int(a.size) * a.dtype.itemsize for a in args) + B * 4

    return pl.pallas_call(
        functools.partial(model_kernel, num_blocks=NUM_BLOCKS),
        out_shape=jax.ShapeDtypeStruct((x.shape[0], 1), jnp.float32),
        in_specs=[vmem() for _ in args],
        out_specs=vmem(),
        cost_estimate=pl.CostEstimate(flops=flops, transcendentals=B,
                                      bytes_accessed=bytes_accessed),
    )(*args)


def init_params(key):
    """PyTorch-equivalent parameters (f32, BN un-folded). Weights are stored
    transposed vs PyTorch, i.e. [in, out]."""
    ks = jax.random.split(key, 16)

    def lin(kw, kb, fan_in, fan_out):
        bound = 1.0 / jnp.sqrt(fan_in)
        w = jax.random.uniform(kw, (fan_in, fan_out), jnp.float32, -bound, bound)
        b = jax.random.uniform(kb, (1, fan_out), jnp.float32, -bound, bound)
        return w, b

    w1, b1 = lin(ks[0], ks[1], INPUT_DIM, H)
    w2, b2 = lin(ks[2], ks[3], H, 1)

    ka = jax.random.split(ks[4], NUM_BLOCKS)
    kab = jax.random.split(ks[5], NUM_BLOCKS)
    kb_ = jax.random.split(ks[6], NUM_BLOCKS)
    kbb = jax.random.split(ks[7], NUM_BLOCKS)
    wa = jnp.stack([lin(ka[i], kab[i], H, 4 * H)[0] for i in range(NUM_BLOCKS)])
    ba = jnp.stack([lin(ka[i], kab[i], H, 4 * H)[1][0] for i in range(NUM_BLOCKS)])
    wb = jnp.stack([lin(kb_[i], kbb[i], 4 * H, H)[0] for i in range(NUM_BLOCKS)])
    bb = jnp.stack([lin(kb_[i], kbb[i], 4 * H, H)[1][0] for i in range(NUM_BLOCKS)])

    bn_g = 1.0 + 0.1 * jax.random.normal(ks[8], (NUM_BLOCKS, H), jnp.float32)
    bn_b = 0.1 * jax.random.normal(ks[9], (NUM_BLOCKS, H), jnp.float32)
    bn_m = 0.1 * jax.random.normal(ks[10], (NUM_BLOCKS, H), jnp.float32)
    bn_v = 1.0 + 0.5 * jax.random.uniform(ks[11], (NUM_BLOCKS, H), jnp.float32)

    return dict(w1=w1, b1=b1, w2=w2, b2=b2,
                wa=wa, ba=ba, wb=wb, bb=bb,
                bn_g=bn_g, bn_b=bn_b, bn_m=bn_m, bn_v=bn_v)


def pack_params(p):
    """One-time fold of BN into the block-A weights + bf16 cast + bias slab.
    Done at init, NOT per forward call."""
    scale = p["bn_g"] * jax.lax.rsqrt(p["bn_v"] + BN_EPS)          # [NB, H]
    shift = p["bn_b"] - p["bn_m"] * scale                          # [NB, H]
    wa_f = scale[:, :, None] * p["wa"]                             # [NB, H, 4H]
    ba_f = p["ba"] + jnp.einsum("bh,bhk->bk", shift, p["wa"])      # [NB, 4H]

    slab = jnp.zeros((8, H), jnp.float32)
    slab = slab.at[0].set(p["b1"][0])
    slab = slab.at[1:1 + NUM_BLOCKS].set(p["bb"])
    slab = slab.at[4].set(p["w2"][:, 0])
    slab = slab.at[5, 0].set(p["b2"][0, 0])

    return dict(
        w1=p["w1"].astype(jnp.bfloat16),       # [IN, H]   bf16
        wa=wa_f.astype(jnp.bfloat16),          # [NB, H, 4H] bf16 (BN folded)
        wb=p["wb"].astype(jnp.bfloat16),       # [NB, 4H, H] bf16
        ba=ba_f.astype(jnp.float32),           # [NB, 4H]  f32 (BN folded)
        slab=slab,                             # [8, H]    f32
    )


def reference_forward(x, p):
    """Pure-JAX reference with the original (un-folded, f32) parameters."""
    h = x @ p["w1"] + p["b1"]
    for blk in range(NUM_BLOCKS):
        y = (h - p["bn_m"][blk]) / jnp.sqrt(p["bn_v"][blk] + BN_EPS) \
            * p["bn_g"][blk] + p["bn_b"][blk]
        a = jnp.maximum(y @ p["wa"][blk] + p["ba"][blk], 0.0)
        h = h + a @ p["wb"][blk] + p["bb"][blk]
    return jax.nn.sigmoid(h @ p["w2"] + p["b2"])


if __name__ == "__main__":
    key = jax.random.PRNGKey(0)
    k_x, k_p = jax.random.split(key)
    x = jax.random.normal(k_x, (B, INPUT_DIM), jnp.float32)

    params = init_params(k_p)
    kparams = pack_params(params)          # one-time fold/pack/cast

    out = model_forward(x, kparams)
    out = jax.block_until_ready(out)

    ref = reference_forward(x, params)
    assert out.shape == (B, 1), out.shape
    assert bool(jnp.all(jnp.isfinite(out)))
    max_err = float(jnp.max(jnp.abs(out - ref)))
    # bf16 weights -> widened tolerance vs. the pure-f32 reference.
    assert max_err < 2e-2, f"max err {max_err}"

    print("KERNEL_OK")
</pallas_src>

<mosaic_0001>
module attributes {stable_mosaic.version = 11 : i64} {
  func.func @model_kernel(%arg0: memref<8x32xf32, #tpu.memory_space<vmem>>, %arg1: memref<32x128xbf16, #tpu.memory_space<vmem>>, %arg2: memref<3x128x512xbf16, #tpu.memory_space<vmem>>, %arg3: memref<3x512x128xbf16, #tpu.memory_space<vmem>>, %arg4: memref<3x512xf32, #tpu.memory_space<vmem>>, %arg5: memref<8x128xf32, #tpu.memory_space<vmem>>, %arg6: memref<8x1xf32, #tpu.memory_space<vmem>>) attributes {dimension_semantics = [], scalar_prefetch = 0 : i64, scratch_operands = 0 : i64, tpu.core_type = #tpu.core_type<tc>} {
    %c0 = arith.constant 0 : index
    %c0_0 = arith.constant 0 : index
    %0 = vector.load %arg5[%c0, %c0_0] : memref<8x128xf32, #tpu.memory_space<vmem>>, vector<1x128xf32>
    %c0_1 = arith.constant 0 : index
    %c0_2 = arith.constant 0 : index
    %1 = vector.load %arg0[%c0_1, %c0_2] : memref<8x32xf32, #tpu.memory_space<vmem>>, vector<8x32xf32>
    %2 = arith.truncf %1 : vector<8x32xf32> to vector<8x32xbf16>
    %c0_3 = arith.constant 0 : index
    %c0_4 = arith.constant 0 : index
    %3 = vector.load %arg1[%c0_3, %c0_4] : memref<32x128xbf16, #tpu.memory_space<vmem>>, vector<32x128xbf16>
    %cst = arith.constant dense<0.000000e+00> : vector<8x128xf32>
    %4 = tpu.matmul %2, %3, %cst {dimension_numbers = #tpu.dot_dimension_numbers<[1], [0], [0], [1], [0, 0, 1, 1], [], []>} : vector<8x32xbf16>, vector<32x128xbf16>, vector<8x128xf32> -> vector<8x128xf32>
    %5 = vector.broadcast %0 : vector<1x128xf32> to vector<8x128xf32>
    %6 = arith.addf %4, %5 : vector<8x128xf32>
    %7 = arith.truncf %6 : vector<8x128xf32> to vector<8x128xbf16>
    %c0_5 = arith.constant 0 : index
    %c0_6 = arith.constant 0 : index
    %c0_7 = arith.constant 0 : index
    %8 = vector.load %arg2[%c0_5, %c0_6, %c0_7] : memref<3x128x512xbf16, #tpu.memory_space<vmem>>, vector<1x128x512xbf16>
    %9 = vector.shape_cast %8 : vector<1x128x512xbf16> to vector<128x512xbf16>
    %cst_8 = arith.constant dense<0.000000e+00> : vector<8x512xf32>
    %10 = tpu.matmul %7, %9, %cst_8 {dimension_numbers = #tpu.dot_dimension_numbers<[1], [0], [0], [1], [0, 0, 1, 1], [], []>} : vector<8x128xbf16>, vector<128x512xbf16>, vector<8x512xf32> -> vector<8x512xf32>
    %c0_9 = arith.constant 0 : index
    %c0_10 = arith.constant 0 : index
    %11 = vector.load %arg4[%c0_9, %c0_10] : memref<3x512xf32, #tpu.memory_space<vmem>>, vector<1x512xf32>
    %12 = vector.broadcast %11 : vector<1x512xf32> to vector<8x512xf32>
    %13 = arith.addf %10, %12 : vector<8x512xf32>
    %cst_11 = arith.constant 0.000000e+00 : f32
    %14 = vector.broadcast %cst_11 : f32 to vector<8x512xf32>
    %15 = arith.maximumf %13, %14 : vector<8x512xf32>
    %16 = arith.truncf %15 : vector<8x512xf32> to vector<8x512xbf16>
    %c0_12 = arith.constant 0 : index
    %c0_13 = arith.constant 0 : index
    %c0_14 = arith.constant 0 : index
    %17 = vector.load %arg3[%c0_12, %c0_13, %c0_14] : memref<3x512x128xbf16, #tpu.memory_space<vmem>>, vector<1x512x128xbf16>
    %18 = vector.shape_cast %17 : vector<1x512x128xbf16> to vector<512x128xbf16>
    %cst_15 = arith.constant dense<0.000000e+00> : vector<8x128xf32>
    %19 = tpu.matmul %16, %18, %cst_15 {dimension_numbers = #tpu.dot_dimension_numbers<[1], [0], [0], [1], [0, 0, 1, 1], [], []>} : vector<8x512xbf16>, vector<512x128xbf16>, vector<8x128xf32> -> vector<8x128xf32>
    %c1 = arith.constant 1 : index
    %c0_16 = arith.constant 0 : index
    %20 = vector.load %arg5[%c1, %c0_16] : memref<8x128xf32, #tpu.memory_space<vmem>>, vector<1x128xf32>
    %21 = vector.broadcast %20 : vector<1x128xf32> to vector<8x128xf32>
    %22 = arith.addf %19, %21 : vector<8x128xf32>
    %23 = arith.addf %6, %22 : vector<8x128xf32>
    %24 = arith.truncf %23 : vector<8x128xf32> to vector<8x128xbf16>
    %c1_17 = arith.constant 1 : index
    %c0_18 = arith.constant 0 : index
    %c0_19 = arith.constant 0 : index
    %25 = vector.load %arg2[%c1_17, %c0_18, %c0_19] : memref<3x128x512xbf16, #tpu.memory_space<vmem>>, vector<1x128x512xbf16>
    %26 = vector.shape_cast %25 : vector<1x128x512xbf16> to vector<128x512xbf16>
    %cst_20 = arith.constant dense<0.000000e+00> : vector<8x512xf32>
    %27 = tpu.matmul %24, %26, %cst_20 {dimension_numbers = #tpu.dot_dimension_numbers<[1], [0], [0], [1], [0, 0, 1, 1], [], []>} : vector<8x128xbf16>, vector<128x512xbf16>, vector<8x512xf32> -> vector<8x512xf32>
    %c1_21 = arith.constant 1 : index
    %c0_22 = arith.constant 0 : index
    %28 = vector.load %arg4[%c1_21, %c0_22] : memref<3x512xf32, #tpu.memory_space<vmem>>, vector<1x512xf32>
    %29 = vector.broadcast %28 : vector<1x512xf32> to vector<8x512xf32>
    %30 = arith.addf %27, %29 : vector<8x512xf32>
    %cst_23 = arith.constant 0.000000e+00 : f32
    %31 = vector.broadcast %cst_23 : f32 to vector<8x512xf32>
    %32 = arith.maximumf %30, %31 : vector<8x512xf32>
    %33 = arith.truncf %32 : vector<8x512xf32> to vector<8x512xbf16>
    %c1_24 = arith.constant 1 : index
    %c0_25 = arith.constant 0 : index
    %c0_26 = arith.constant 0 : index
    %34 = vector.load %arg3[%c1_24, %c0_25, %c0_26] : memref<3x512x128xbf16, #tpu.memory_space<vmem>>, vector<1x512x128xbf16>
    %35 = vector.shape_cast %34 : vector<1x512x128xbf16> to vector<512x128xbf16>
    %cst_27 = arith.constant dense<0.000000e+00> : vector<8x128xf32>
    %36 = tpu.matmul %33, %35, %cst_27 {dimension_numbers = #tpu.dot_dimension_numbers<[1], [0], [0], [1], [0, 0, 1, 1], [], []>} : vector<8x512xbf16>, vector<512x128xbf16>, vector<8x128xf32> -> vector<8x128xf32>
    %c2 = arith.constant 2 : index
    %c0_28 = arith.constant 0 : index
    %37 = vector.load %arg5[%c2, %c0_28] : memref<8x128xf32, #tpu.memory_space<vmem>>, vector<1x128xf32>
    %38 = vector.broadcast %37 : vector<1x128xf32> to vector<8x128xf32>
    %39 = arith.addf %36, %38 : vector<8x128xf32>
    %40 = arith.addf %23, %39 : vector<8x128xf32>
    %41 = arith.truncf %40 : vector<8x128xf32> to vector<8x128xbf16>
    %c2_29 = arith.constant 2 : index
    %c0_30 = arith.constant 0 : index
    %c0_31 = arith.constant 0 : index
    %42 = vector.load %arg2[%c2_29, %c0_30, %c0_31] : memref<3x128x512xbf16, #tpu.memory_space<vmem>>, vector<1x128x512xbf16>
    %43 = vector.shape_cast %42 : vector<1x128x512xbf16> to vector<128x512xbf16>
    %cst_32 = arith.constant dense<0.000000e+00> : vector<8x512xf32>
    %44 = tpu.matmul %41, %43, %cst_32 {dimension_numbers = #tpu.dot_dimension_numbers<[1], [0], [0], [1], [0, 0, 1, 1], [], []>} : vector<8x128xbf16>, vector<128x512xbf16>, vector<8x512xf32> -> vector<8x512xf32>
    %c2_33 = arith.constant 2 : index
    %c0_34 = arith.constant 0 : index
    %45 = vector.load %arg4[%c2_33, %c0_34] : memref<3x512xf32, #tpu.memory_space<vmem>>, vector<1x512xf32>
    %46 = vector.broadcast %45 : vector<1x512xf32> to vector<8x512xf32>
    %47 = arith.addf %44, %46 : vector<8x512xf32>
    %cst_35 = arith.constant 0.000000e+00 : f32
    %48 = vector.broadcast %cst_35 : f32 to vector<8x512xf32>
    %49 = arith.maximumf %47, %48 : vector<8x512xf32>
    %50 = arith.truncf %49 : vector<8x512xf32> to vector<8x512xbf16>
    %c2_36 = arith.constant 2 : index
    %c0_37 = arith.constant 0 : index
    %c0_38 = arith.constant 0 : index
    %51 = vector.load %arg3[%c2_36, %c0_37, %c0_38] : memref<3x512x128xbf16, #tpu.memory_space<vmem>>, vector<1x512x128xbf16>
    %52 = vector.shape_cast %51 : vector<1x512x128xbf16> to vector<512x128xbf16>
    %cst_39 = arith.constant dense<0.000000e+00> : vector<8x128xf32>
    %53 = tpu.matmul %50, %52, %cst_39 {dimension_numbers = #tpu.dot_dimension_numbers<[1], [0], [0], [1], [0, 0, 1, 1], [], []>} : vector<8x512xbf16>, vector<512x128xbf16>, vector<8x128xf32> -> vector<8x128xf32>
    %c3 = arith.constant 3 : index
    %c0_40 = arith.constant 0 : index
    %54 = vector.load %arg5[%c3, %c0_40] : memref<8x128xf32, #tpu.memory_space<vmem>>, vector<1x128xf32>
    %55 = vector.broadcast %54 : vector<1x128xf32> to vector<8x128xf32>
    %56 = arith.addf %53, %55 : vector<8x128xf32>
    %57 = arith.addf %40, %56 : vector<8x128xf32>
    %c4 = arith.constant 4 : index
    %c0_41 = arith.constant 0 : index
    %58 = vector.load %arg5[%c4, %c0_41] : memref<8x128xf32, #tpu.memory_space<vmem>>, vector<1x128xf32>
    %c5 = arith.constant 5 : index
    %c0_42 = arith.constant 0 : index
    %59 = vector.load %arg5[%c5, %c0_42] : memref<8x128xf32, #tpu.memory_space<vmem>>, vector<1x1xf32>
    %60 = vector.broadcast %58 : vector<1x128xf32> to vector<8x128xf32>
    %61 = arith.mulf %57, %60 : vector<8x128xf32>
    %cst_43 = arith.constant dense<0.000000e+00> : vector<8xf32>
    %62 = vector.multi_reduction <add>, %61, %cst_43 [1] : vector<8x128xf32> to vector<8xf32>
    %63 = vector.shape_cast %62 : vector<8xf32> to vector<8x1xf32>
    %64 = vector.broadcast %59 : vector<1x1xf32> to vector<8x1xf32>
    %65 = arith.addf %63, %64 : vector<8x1xf32>
    %66 = arith.negf %65 : vector<8x1xf32>
    %67 = math.exp %66 : vector<8x1xf32>
    %cst_44 = arith.constant 1.000000e+00 : f32
    %68 = vector.broadcast %cst_44 : f32 to vector<8x1xf32>
    %69 = arith.addf %68, %67 : vector<8x1xf32>
    %70 = arith.divf %68, %69 : vector<8x1xf32>
    %c0_45 = arith.constant 0 : index
    %c0_46 = arith.constant 0 : index
    %71 = vector.load %arg6[%c0_45, %c0_46] : memref<8x1xf32, #tpu.memory_space<vmem>>, vector<8x1xf32>
    tpu.vector_store %arg6[%c0_45, %c0_46], %70 {strides = array<i32>} : memref<8x1xf32, #tpu.memory_space<vmem>>, vector<8x1xf32>,
    return
  }
}

</mosaic_0001>

<llo_original>
// kernel: tpu_custom_call.1
$region0: #{tpu_custom_call.1}
  #allocation0 [shape = 'u32[]', space=smem, size = 0x4, offset = 0x4, fixed_abs, tag = 'smem constant byte address 0x4 - core index']
  #allocation1 [shape = 'u32[144,128]{1,0:T(1,128)}', space=vmem, size = 0x12000, scoped, tag = 'internal scratch']
  %s0 = inlined_call_operand.hbm [shape: f32[8,32], index: 0, kind: input, shape index: {}]
  %s1 = inlined_call_operand.hbm [shape: bf16[32,128], index: 1, kind: input, shape index: {}]
  %s2 = inlined_call_operand.hbm [shape: bf16[3,128,512], index: 2, kind: input, shape index: {}]
  %s3 = inlined_call_operand.hbm [shape: bf16[3,512,128], index: 3, kind: input, shape index: {}]
  %s4 = inlined_call_operand.hbm [shape: f32[3,512], index: 4, kind: input, shape index: {}]
  %s5 = inlined_call_operand.vmem [shape: f32[8,128], index: 5, kind: input, shape index: {}]
  %s6 = inlined_call_operand.vmem [shape: f32[8,1], index: 6, kind: output, shape index: {}]
  %s7 = sld [smem:[#allocation0]]
  $region54: #{tpu_custom_call.1} parent=0
    _
  %s9 = ssub.s32 1, %s7
  %s10 = scalar_select 0, %s9, %s7
  $region1: #{tpu_custom_call.1} parent=0
    #allocation2 [shape = 'u8[4096]{0}', space=vmem, size = 0x1000, scoped, tag = 'input window, operand 0, single buffered']
    #allocation3 [shape = 's32[1]{0}', space=sflag, size = 0x4, scoped, tag = 'scoped memory for tpu_custom_call.1']
    #allocation4 [shape = 'u8[8192]{0}', space=vmem, size = 0x2000, scoped, tag = 'input window, operand 1, single buffered']
    #allocation5 [shape = 's32[1]{0}', space=sflag, size = 0x4, scoped, tag = 'scoped memory for tpu_custom_call.1']
    #allocation6 [shape = 'u8[393216]{0}', space=vmem, size = 0x60000, scoped, tag = 'input window, operand 2, single buffered']
    #allocation7 [shape = 'u8[393216]{0}', space=vmem, size = 0x60000, scoped, tag = 'input window, operand 3, single buffered']
    #allocation8 [shape = 's32[1]{0}', space=sflag, size = 0x4, scoped, tag = 'scoped memory for tpu_custom_call.1']
    #allocation9 [shape = 'u8[8192]{0}', space=vmem, size = 0x2000, scoped, tag = 'input window, operand 4, single buffered']
    %11 = vsyncpa [#allocation3], 0
    %12 = vsyncpa [#allocation5], 0
    %13 = vsyncpa [#allocation8], 0
    // Predicated region
    $region2: #{tpu_custom_call.1} parent=1 // pred_check
      _
    $region3: #{tpu_custom_call.1} parent=1 // pred_check_branch
      %15 = sbr.rel (0) target = $region5
    $region4: #{tpu_custom_call.1} parent=1 // pred_region
      %s17 = ssub.s32 128, 128
      %18 = vsyncadd [#allocation3], %s17
      %s20 = sshll.u32 [#allocation2], 4
      %s21 = int_to_ptr.vmem [resolvable:$true] %s20
      %23 = dma.hbm_to_vmem [thread:$0]  %s0, 128, %s21, [#allocation3]
    $region5: #{tpu_custom_call.1} parent=1 // pred_fallthru
      _
    // Predicated region
    $region6: #{tpu_custom_call.1} parent=1 // pred_check
      _
    $region7: #{tpu_custom_call.1} parent=1 // pred_check_branch
      %25 = sbr.rel (0) target = $region9
    $region8: #{tpu_custom_call.1} parent=1 // pred_region
      %s27 = ssub.s32 256, 256
      %28 = vsyncadd [#allocation5], %s27
      %s29 = sshll.u32 [#allocation4], 4
      %s30 = int_to_ptr.vmem [resolvable:$true] %s29
      %35 = dma.hbm_to_vmem [thread:$0]  %s1, 256, %s30, [#allocation5], 64, 64, 4
    $region9: #{tpu_custom_call.1} parent=1 // pred_fallthru
      _
    // Predicated region
    $region10: #{tpu_custom_call.1} parent=1 // pred_check
      _
    $region11: #{tpu_custom_call.1} parent=1 // pred_check_branch
      %37 = sbr.rel (0) target = $region13
    $region12: #{tpu_custom_call.1} parent=1 // pred_region
      %s39 = ssub.s32 12288, 12288
      %40 = vsyncadd [#allocation5], %s39
      %s41 = sshll.u32 [#allocation6], 4
      %s42 = int_to_ptr.vmem [resolvable:$true] %s41
      %47 = dma.hbm_to_vmem [thread:$0]  %s2, 12288, %s42, [#allocation5], 256, 256, 16
    $region13: #{tpu_custom_call.1} parent=1 // pred_fallthru
      _
    // Predicated region
    $region14: #{tpu_custom_call.1} parent=1 // pred_check
      _
    $region15: #{tpu_custom_call.1} parent=1 // pred_check_branch
      %49 = sbr.rel (0) target = $region17
    $region16: #{tpu_custom_call.1} parent=1 // pred_region
      %s51 = ssub.s32 12288, 12288
      %52 = vsyncadd [#allocation8], %s51
      %s53 = sshll.u32 [#allocation7], 4
      %s54 = int_to_ptr.vmem [resolvable:$true] %s53
      %59 = dma.hbm_to_vmem [thread:$0]  %s3, 12288, %s54, [#allocation8], 64, 64, 4
    $region17: #{tpu_custom_call.1} parent=1 // pred_fallthru
      _
    // Predicated region
    $region18: #{tpu_custom_call.1} parent=1 // pred_check
      _
    $region19: #{tpu_custom_call.1} parent=1 // pred_check_branch
      %61 = sbr.rel (0) target = $region21
    $region20: #{tpu_custom_call.1} parent=1 // pred_region
      %s63 = ssub.s32 256, 256
      %64 = vsyncadd [#allocation8], %s63
      %s66 = sshll.u32 [#allocation9], 4
      %s67 = int_to_ptr.vmem [resolvable:$true] %s66
      %69 = dma.hbm_to_vmem [thread:$0]  %s4, 256, %s67, [#allocation8]
    $region21: #{tpu_custom_call.1} parent=1 // pred_fallthru
      _
    // Predicated region
    $region22: #{tpu_custom_call.1} parent=1 // pred_check
      _
    $region23: #{tpu_custom_call.1} parent=1 // pred_check_branch
      %71 = sbr.rel (0) target = $region25
    $region24: #{tpu_custom_call.1} parent=1 // pred_region
      _
    $region25: #{tpu_custom_call.1} parent=1 // pred_fallthru
      _
    // Predicated region
    $region26: #{tpu_custom_call.1} parent=1 // pred_check
      _
    $region27: #{tpu_custom_call.1} parent=1 // pred_check_branch
      %73 = sbr.rel (0) target = $region29
    $region28: #{tpu_custom_call.1} parent=1 // pred_region
      %74 = dma.done [#allocation3], 128
    $region29: #{tpu_custom_call.1} parent=1 // pred_fallthru
      _
    // Predicated region
    $region30: #{tpu_custom_call.1} parent=1 // pred_check
      _
    $region31: #{tpu_custom_call.1} parent=1 // pred_check_branch
      %76 = sbr.rel (0) target = $region33
    $region32: #{tpu_custom_call.1} parent=1 // pred_region
      %77 = dma.done [#allocation5], 256
    $region33: #{tpu_custom_call.1} parent=1 // pred_fallthru
      _
    // Predicated region
    $region34: #{tpu_custom_call.1} parent=1 // pred_check
      _
    $region35: #{tpu_custom_call.1} parent=1 // pred_check_branch
      %79 = sbr.rel (0) target = $region37
    $region36: #{tpu_custom_call.1} parent=1 // pred_region
      %80 = dma.done [#allocation5], 12288
    $region37: #{tpu_custom_call.1} parent=1 // pred_fallthru
      _
    // Predicated region
    $region38: #{tpu_custom_call.1} parent=1 // pred_check
      _
    $region39: #{tpu_custom_call.1} parent=1 // pred_check_branch
      %82 = sbr.rel (0) target = $region41
    $region40: #{tpu_custom_call.1} parent=1 // pred_region
      %83 = dma.done [#allocation8], 12288
    $region41: #{tpu_custom_call.1} parent=1 // pred_fallthru
      _
    // Predicated region
    $region42: #{tpu_custom_call.1} parent=1 // pred_check
      _
    $region43: #{tpu_custom_call.1} parent=1 // pred_check_branch
      %85 = sbr.rel (0) target = $region45
    $region44: #{tpu_custom_call.1} parent=1 // pred_region
      %86 = dma.done [#allocation8], 256
    $region45: #{tpu_custom_call.1} parent=1 // pred_fallthru
      _
    %v88 = vld [vmem:[%s5] sm:$0x1]
    %v89 = vld [vmem:[#allocation2] sm:$0xff]
    %v90 = vpack.c.bf16 %v89, %v89
    %v91 = vld [vmem:[#allocation4] sm:$0xf]
    %v92 = vld [vmem:[#allocation4 + $0x4] sm:$0xf]
    %v93 = vld [vmem:[#allocation4 + $0x8] sm:$0xf]
    %v94 = vld [vmem:[#allocation4 + $0xc] sm:$0xf]
    %v95 = vlaneseq
    %v96 = vshrl.u32 %v95, 7
    %v97 = vsub.s32 0, %v96
    %v98 = vrot.slane %v88, %v97
    %v103 = vunpack.c.l.b16 %v91
    %v104 = vunpack.c.l.b16 %v92
    %v105 = vunpack.c.l.b16 %v93
    %v106 = vunpack.c.l.b16 %v94
    %v107 = vpack.c.b16 %v104, %v103
    %v108 = vpack.c.b16 %v106, %v105
    %vm111 = vcmask 261120
    %v113 = vsel %vm111, %v90, 0
    %115 = vmatprep.subr.bf16.mxu0 0
    %116 = vmatpush1.bf16.msra.mxu0 %v107
    %117 = vmatprep.subr.bf16.mxu0 0
    %118 = vmatpush1.bf16.msra.mxu0 %v108
    %119 = vmatprep.subr.bf16.mxu0 0
    %120 = vmatpush1.bf16.msra.mxu0 0
    %121 = vmatprep.subr.bf16.mxu0 0
    %122 = vmatpush1.bf16.msra.mxu0 0
    %123 = vmatprep.subr.bf16.mxu0 0
    %124 = vmatpush1.bf16.msra.mxu0 0
    %125 = vmatprep.subr.bf16.mxu0 0
    %126 = vmatpush1.bf16.msra.mxu0 0
    %127 = vmatprep.subr.bf16.mxu0 0
    %128 = vmatpush1.bf16.msra.mxu0 0
    %129 = vmatprep.subr.bf16.mxu0 0
    %130 = vmatpush1.bf16.msra.mxu0 0
    %131 = vmatprep.subr.bf16.mxu0 0
    %132 = vmatpush1.bf16.msra.mxu0 0
    %133 = vmatprep.subr.bf16.mxu0 0
    %134 = vmatpush1.bf16.msra.mxu0 0
    %135 = vmatprep.subr.bf16.mxu0 0
    %136 = vmatpush1.bf16.msra.mxu0 0
    %137 = vmatprep.subr.bf16.mxu0 0
    %138 = vmatpush1.bf16.msra.mxu0 0
    %139 = vmatprep.subr.bf16.mxu0 0
    %140 = vmatpush1.bf16.msra.mxu0 0
    %141 = vmatprep.subr.bf16.mxu0 0
    %142 = vmatpush1.bf16.msra.mxu0 0
    %143 = vmatprep.subr.bf16.mxu0 0
    %144 = vmatpush1.bf16.msra.mxu0 0
    %145 = vmatprep.subr.bf16.mxu0 0
    %146 = vmatpush1.bf16.msra.mxu0 0
    %147 = vmatprep.mubr.bf16.mxu0 0
    %148 = vmatmul.mubr.bf16.gmra.mrb[0].mxu0 %v113
    %v149 = vpop.f32.mrb[0].mxu0
    %v150 = vadd.f32 %v98, %v149
    %v151 = vpop.f32.mrb[0].mxu0
    %v152 = vpop.f32.mrb[0].mxu0
    %v153 = vpop.f32.mrb[0].mxu0
    %154 = vdwg.mxu0
    %v155 = vpack.c.bf16 %v150, %v150
    %v156 = vld [vmem:[#allocation6] sm:$0xff]
    %v157 = vld [vmem:[#allocation6 + $0x8] sm:$0xff]
    %v158 = vld [vmem:[#allocation6 + $0x10] sm:$0xff]
    %v159 = vld [vmem:[#allocation6 + $0x18] sm:$0xff]
    %v160 = vld [vmem:[#allocation6 + $0x20] sm:$0xff]
    %v161 = vld [vmem:[#allocation6 + $0x28] sm:$0xff]
    %v162 = vld [vmem:[#allocation6 + $0x30] sm:$0xff]
    %v163 = vld [vmem:[#allocation6 + $0x38] sm:$0xff]
    %v164 = vld [vmem:[#allocation6 + $0x40] sm:$0xff]
    %v165 = vld [vmem:[#allocation6 + $0x48] sm:$0xff]
    %v166 = vld [vmem:[#allocation6 + $0x50] sm:$0xff]
    %v167 = vld [vmem:[#allocation6 + $0x58] sm:$0xff]
    %v168 = vld [vmem:[#allocation6 + $0x60] sm:$0xff]
    %v169 = vld [vmem:[#allocation6 + $0x68] sm:$0xff]
    %v170 = vld [vmem:[#allocation6 + $0x70] sm:$0xff]
    %v171 = vld [vmem:[#allocation6 + $0x78] sm:$0xff]
    %v172 = vld [vmem:[#allocation6 + $0x80] sm:$0xff]
    %v173 = vld [vmem:[#allocation6 + $0x88] sm:$0xff]
    %v174 = vld [vmem:[#allocation6 + $0x90] sm:$0xff]
    %v175 = vld [vmem:[#allocation6 + $0x98] sm:$0xff]
    %v176 = vld [vmem:[#allocation6 + $0xa0] sm:$0xff]
    %v177 = vld [vmem:[#allocation6 + $0xa8] sm:$0xff]
    %v178 = vld [vmem:[#allocation6 + $0xb0] sm:$0xff]
    %v179 = vld [vmem:[#allocation6 + $0xb8] sm:$0xff]
    %v180 = vld [vmem:[#allocation6 + $0xc0] sm:$0xff]
    %v181 = vld [vmem:[#allocation6 + $0xc8] sm:$0xff]
    %v182 = vld [vmem:[#allocation6 + $0xd0] sm:$0xff]
    %v183 = vld [vmem:[#allocation6 + $0xd8] sm:$0xff]
    %v184 = vld [vmem:[#allocation6 + $0xe0] sm:$0xff]
    %v185 = vld [vmem:[#allocation6 + $0xe8] sm:$0xff]
    %v186 = vld [vmem:[#allocation6 + $0xf0] sm:$0xff]
    %v187 = vld [vmem:[#allocation6 + $0xf8] sm:$0xff]
    %v188 = vld [vmem:[#allocation9] ss:$4 sm:$0xf]
    %v190 = vlaneseq
    %v191 = vshrl.u32 %v190, 7
    %v192 = vsub.s32 0, %v191
    %v193 = vrot.slane %v188, %v192
    %v194 = vlaneseq
    %v195 = vshrl.u32 %v194, 7
    %v196 = vsub.s32 1, %v195
    %v197 = vrot.slane %v188, %v196
    %v198 = vlaneseq
    %v199 = vshrl.u32 %v198, 7
    %v200 = vsub.s32 2, %v199
    %v201 = vrot.slane %v188, %v200
    %v202 = vlaneseq
    %v203 = vshrl.u32 %v202, 7
    %v204 = vsub.s32 3, %v203
    %v205 = vrot.slane %v188, %v204
    %v242 = vunpack.c.l.b16 %v156
    %v243 = vunpack.c.h.b16 %v156
    %v244 = vunpack.c.l.b16 %v157
    %v245 = vunpack.c.h.b16 %v157
    %v246 = vunpack.c.l.b16 %v158
    %v247 = vunpack.c.h.b16 %v158
    %v248 = vunpack.c.l.b16 %v159
    %v249 = vunpack.c.h.b16 %v159
    %v250 = vunpack.c.l.b16 %v160
    %v251 = vunpack.c.h.b16 %v160
    %v252 = vunpack.c.l.b16 %v161
    %v253 = vunpack.c.h.b16 %v161
    %v254 = vunpack.c.l.b16 %v162
    %v255 = vunpack.c.h.b16 %v162
    %v256 = vunpack.c.l.b16 %v163
    %v257 = vunpack.c.h.b16 %v163
    %v258 = vunpack.c.l.b16 %v164
    %v259 = vunpack.c.h.b16 %v164
    %v260 = vunpack.c.l.b16 %v165
    %v261 = vunpack.c.h.b16 %v165
    %v262 = vunpack.c.l.b16 %v166
    %v263 = vunpack.c.h.b16 %v166
    %v264 = vunpack.c.l.b16 %v167
    %v265 = vunpack.c.h.b16 %v167
    %v266 = vunpack.c.l.b16 %v168
    %v267 = vunpack.c.h.b16 %v168
    %v268 = vunpack.c.l.b16 %v169
    %v269 = vunpack.c.h.b16 %v169
    %v270 = vunpack.c.l.b16 %v170
    %v271 = vunpack.c.h.b16 %v170
    %v272 = vunpack.c.l.b16 %v171
    %v273 = vunpack.c.h.b16 %v171
    %v274 = vunpack.c.l.b16 %v172
    %v275 = vunpack.c.h.b16 %v172
    %v276 = vunpack.c.l.b16 %v173
    %v277 = vunpack.c.h.b16 %v173
    %v278 = vunpack.c.l.b16 %v174
    %v279 = vunpack.c.h.b16 %v174
    %v280 = vunpack.c.l.b16 %v175
    %v281 = vunpack.c.h.b16 %v175
    %v282 = vunpack.c.l.b16 %v176
    %v283 = vunpack.c.h.b16 %v176
    %v284 = vunpack.c.l.b16 %v177
    %v285 = vunpack.c.h.b16 %v177
    %v286 = vunpack.c.l.b16 %v178
    %v287 = vunpack.c.h.b16 %v178
    %v288 = vunpack.c.l.b16 %v179
    %v289 = vunpack.c.h.b16 %v179
    %v290 = vunpack.c.l.b16 %v180
    %v291 = vunpack.c.h.b16 %v180
    %v292 = vunpack.c.l.b16 %v181
    %v293 = vunpack.c.h.b16 %v181
    %v294 = vunpack.c.l.b16 %v182
    %v295 = vunpack.c.h.b16 %v182
    %v296 = vunpack.c.l.b16 %v183
    %v297 = vunpack.c.h.b16 %v183
    %v298 = vunpack.c.l.b16 %v184
    %v299 = vunpack.c.h.b16 %v184
    %v300 = vunpack.c.l.b16 %v185
    %v301 = vunpack.c.h.b16 %v185
    %v302 = vunpack.c.l.b16 %v186
    %v303 = vunpack.c.h.b16 %v186
    %v304 = vunpack.c.l.b16 %v187
    %v305 = vunpack.c.h.b16 %v187
    %v306 = vpack.c.b16 %v246, %v242
    %v307 = vpack.c.b16 %v247, %v243
    %v308 = vpack.c.b16 %v248, %v244
    %v309 = vpack.c.b16 %v249, %v245
    %v310 = vpack.c.b16 %v254, %v250
    %v311 = vpack.c.b16 %v255, %v251
    %v312 = vpack.c.b16 %v256, %v252
    %v313 = vpack.c.b16 %v257, %v253
    %v314 = vpack.c.b16 %v262, %v258
    %v315 = vpack.c.b16 %v263, %v259
    %v316 = vpack.c.b16 %v264, %v260
    %v317 = vpack.c.b16 %v265, %v261
    %v318 = vpack.c.b16 %v270, %v266
    %v319 = vpack.c.b16 %v271, %v267
    %v320 = vpack.c.b16 %v272, %v268
    %v321 = vpack.c.b16 %v273, %v269
    %v322 = vpack.c.b16 %v278, %v274
    %v323 = vpack.c.b16 %v279, %v275
    %v324 = vpack.c.b16 %v280, %v276
    %v325 = vpack.c.b16 %v281, %v277
    %v326 = vpack.c.b16 %v286, %v282
    %v327 = vpack.c.b16 %v287, %v283
    %v328 = vpack.c.b16 %v288, %v284
    %v329 = vpack.c.b16 %v289, %v285
    %v330 = vpack.c.b16 %v294, %v290
    %v331 = vpack.c.b16 %v295, %v291
    %v332 = vpack.c.b16 %v296, %v292
    %v333 = vpack.c.b16 %v297, %v293
    %v334 = vpack.c.b16 %v302, %v298
    %v335 = vpack.c.b16 %v303, %v299
    %v336 = vpack.c.b16 %v304, %v300
    %v337 = vpack.c.b16 %v305, %v301
    %370 = vmatprep.subr.bf16.mxu0 %v307
    %371 = vmatpush1.bf16.msra.mxu0 %v306
    %372 = vmatprep.subr.bf16.mxu0 %v311
    %373 = vmatpush1.bf16.msra.mxu0 %v310
    %374 = vmatprep.subr.bf16.mxu0 %v315
    %375 = vmatpush1.bf16.msra.mxu0 %v314
    %376 = vmatprep.subr.bf16.mxu0 %v319
    %377 = vmatpush1.bf16.msra.mxu0 %v318
    %378 = vmatprep.subr.bf16.mxu0 %v323
    %379 = vmatpush1.bf16.msra.mxu0 %v322
    %380 = vmatprep.subr.bf16.mxu0 %v327
    %381 = vmatpush1.bf16.msra.mxu0 %v326
    %382 = vmatprep.subr.bf16.mxu0 %v331
    %383 = vmatpush1.bf16.msra.mxu0 %v330
    %384 = vmatprep.subr.bf16.mxu0 %v335
    %385 = vmatpush1.bf16.msra.mxu0 %v334
    %386 = vmatprep.subr.bf16.mxu0 0
    %387 = vmatpush1.bf16.msra.mxu0 0
    %388 = vmatprep.subr.bf16.mxu0 0
    %389 = vmatpush1.bf16.msra.mxu0 0
    %390 = vmatprep.subr.bf16.mxu0 0
    %391 = vmatpush1.bf16.msra.mxu0 0
    %392 = vmatprep.subr.bf16.mxu0 0
    %393 = vmatpush1.bf16.msra.mxu0 0
    %394 = vmatprep.subr.bf16.mxu0 0
    %395 = vmatpush1.bf16.msra.mxu0 0
    %396 = vmatprep.subr.bf16.mxu0 0
    %397 = vmatpush1.bf16.msra.mxu0 0
    %398 = vmatprep.subr.bf16.mxu0 0
    %399 = vmatpush1.bf16.msra.mxu0 0
    %400 = vmatprep.subr.bf16.mxu0 0
    %401 = vmatpush1.bf16.msra.mxu0 0
    %402 = vmatprep.mubr.bf16.mxu0 0
    %403 = vmatmul.mubr.bf16.gmra.mrb[0].mxu0 %v155
    %v404 = vpop.f32.mrb[0].mxu0
    %v405 = vadd.f32 %v193, %v404
    %v406 = vpop.f32.mrb[0].mxu0
    %v407 = vadd.f32 %v197, %v406
    %v408 = vpop.f32.mrb[0].mxu0
    %v409 = vpop.f32.mrb[0].mxu0
    %410 = vdwg.mxu0
    %411 = vmatprep.subr.bf16.mxu0 %v309
    %412 = vmatpush1.bf16.msra.mxu0 %v308
    %413 = vmatprep.subr.bf16.mxu0 %v313
    %414 = vmatpush1.bf16.msra.mxu0 %v312
    %415 = vmatprep.subr.bf16.mxu0 %v317
    %416 = vmatpush1.bf16.msra.mxu0 %v316
    %417 = vmatprep.subr.bf16.mxu0 %v321
    %418 = vmatpush1.bf16.msra.mxu0 %v320
    %419 = vmatprep.subr.bf16.mxu0 %v325
    %420 = vmatpush1.bf16.msra.mxu0 %v324
    %421 = vmatprep.subr.bf16.mxu0 %v329
    %422 = vmatpush1.bf16.msra.mxu0 %v328
    %423 = vmatprep.subr.bf16.mxu0 %v333
    %424 = vmatpush1.bf16.msra.mxu0 %v332
    %425 = vmatprep.subr.bf16.mxu0 %v337
    %426 = vmatpush1.bf16.msra.mxu0 %v336
    %427 = vmatprep.subr.bf16.mxu0 0
    %428 = vmatpush1.bf16.msra.mxu0 0
    %429 = vmatprep.subr.bf16.mxu0 0
    %430 = vmatpush1.bf16.msra.mxu0 0
    %431 = vmatprep.subr.bf16.mxu0 0
    %432 = vmatpush1.bf16.msra.mxu0 0
    %433 = vmatprep.subr.bf16.mxu0 0
    %434 = vmatpush1.bf16.msra.mxu0 0
    %435 = vmatprep.subr.bf16.mxu0 0
    %436 = vmatpush1.bf16.msra.mxu0 0
    %437 = vmatprep.subr.bf16.mxu0 0
    %438 = vmatpush1.bf16.msra.mxu0 0
    %439 = vmatprep.subr.bf16.mxu0 0
    %440 = vmatpush1.bf16.msra.mxu0 0
    %441 = vmatprep.subr.bf16.mxu0 0
    %442 = vmatpush1.bf16.msra.mxu0 0
    %443 = vmatprep.mubr.bf16.mxu0 0
    %444 = vmatmul.mubr.bf16.gmra.mrb[0].mxu0 %v155
    %v445 = vpop.f32.mrb[0].mxu0
    %v446 = vadd.f32 %v201, %v445
    %v447 = vpop.f32.mrb[0].mxu0
    %v448 = vadd.f32 %v205, %v447
    %v449 = vpop.f32.mrb[0].mxu0
    %v450 = vpop.f32.mrb[0].mxu0
    %451 = vdwg.mxu0
    %v452 = vmax.f32 %v405, 0.0
    %v453 = vmax.f32 %v407, 0.0
    %v454 = vmax.f32 %v446, 0.0
    %v455 = vmax.f32 %v448, 0.0
    %v456 = vpack.c.bf16 %v452, %v452
    %v457 = vpack.c.bf16 %v453, %v453
    %v458 = vpack.c.bf16 %v454, %v454
    %v459 = vpack.c.bf16 %v455, %v455
    %v460 = vld [vmem:[#allocation7] sm:$0xf]
    %v461 = vld [vmem:[#allocation7 + $0x4] sm:$0xf]
    %v462 = vld [vmem:[#allocation7 + $0x8] sm:$0xf]
    %v463 = vld [vmem:[#allocation7 + $0xc] sm:$0xf]
    %v464 = vld [vmem:[#allocation7 + $0x10] sm:$0xf]
    %v465 = vld [vmem:[#allocation7 + $0x14] sm:$0xf]
    %v466 = vld [vmem:[#allocation7 + $0x18] sm:$0xf]
    %v467 = vld [vmem:[#allocation7 + $0x1c] sm:$0xf]
    %v468 = vld [vmem:[#allocation7 + $0x20] sm:$0xf]
    %v469 = vld [vmem:[#allocation7 + $0x24] sm:$0xf]
    %v470 = vld [vmem:[#allocation7 + $0x28] sm:$0xf]
    %v471 = vld [vmem:[#allocation7 + $0x2c] sm:$0xf]
    %v472 = vld [vmem:[#allocation7 + $0x30] sm:$0xf]
    %v473 = vld [vmem:[#allocation7 + $0x34] sm:$0xf]
    %v474 = vld [vmem:[#allocation7 + $0x38] sm:$0xf]
    %v475 = vld [vmem:[#allocation7 + $0x3c] sm:$0xf]
    %v476 = vld [vmem:[#allocation7 + $0x40] sm:$0xf]
    %v477 = vld [vmem:[#allocation7 + $0x44] sm:$0xf]
    %v478 = vld [vmem:[#allocation7 + $0x48] sm:$0xf]
    %v479 = vld [vmem:[#allocation7 + $0x4c] sm:$0xf]
    %v480 = vld [vmem:[#allocation7 + $0x50] sm:$0xf]
    %v481 = vld [vmem:[#allocation7 + $0x54] sm:$0xf]
    %v482 = vld [vmem:[#allocation7 + $0x58] sm:$0xf]
    %v483 = vld [vmem:[#allocation7 + $0x5c] sm:$0xf]
    %v484 = vld [vmem:[#allocation7 + $0x60] sm:$0xf]
    %v485 = vld [vmem:[#allocation7 + $0x64] sm:$0xf]
    %v486 = vld [vmem:[#allocation7 + $0x68] sm:$0xf]
    %v487 = vld [vmem:[#allocation7 + $0x6c] sm:$0xf]
    %v488 = vld [vmem:[#allocation7 + $0x70] sm:$0xf]
    %v489 = vld [vmem:[#allocation7 + $0x74] sm:$0xf]
    %v490 = vld [vmem:[#allocation7 + $0x78] sm:$0xf]
    %v491 = vld [vmem:[#allocation7 + $0x7c] sm:$0xf]
    %v492 = vld [vmem:[#allocation7 + $0x80] sm:$0xf]
    %v493 = vld [vmem:[#allocation7 + $0x84] sm:$0xf]
    %v494 = vld [vmem:[#allocation7 + $0x88] sm:$0xf]
    %v495 = vld [vmem:[#allocation7 + $0x8c] sm:$0xf]
    %v496 = vld [vmem:[#allocation7 + $0x90] sm:$0xf]
    %v497 = vld [vmem:[#allocation7 + $0x94] sm:$0xf]
    %v498 = vld [vmem:[#allocation7 + $0x98] sm:$0xf]
    %v499 = vld [vmem:[#allocation7 + $0x9c] sm:$0xf]
    %v500 = vld [vmem:[#allocation7 + $0xa0] sm:$0xf]
    %v501 = vld [vmem:[#allocation7 + $0xa4] sm:$0xf]
    %v502 = vld [vmem:[#allocation7 + $0xa8] sm:$0xf]
    %v503 = vld [vmem:[#allocation7 + $0xac] sm:$0xf]
    %v504 = vld [vmem:[#allocation7 + $0xb0] sm:$0xf]
    %v505 = vld [vmem:[#allocation7 + $0xb4] sm:$0xf]
    %v506 = vld [vmem:[#allocation7 + $0xb8] sm:$0xf]
    %v507 = vld [vmem:[#allocation7 + $0xbc] sm:$0xf]
    %v508 = vld [vmem:[#allocation7 + $0xc0] sm:$0xf]
    %v509 = vld [vmem:[#allocation7 + $0xc4] sm:$0xf]
    %v510 = vld [vmem:[#allocation7 + $0xc8] sm:$0xf]
    %v511 = vld [vmem:[#allocation7 + $0xcc] sm:$0xf]
    %v512 = vld [vmem:[#allocation7 + $0xd0] sm:$0xf]
    %v513 = vld [vmem:[#allocation7 + $0xd4] sm:$0xf]
    %v514 = vld [vmem:[#allocation7 + $0xd8] sm:$0xf]
    %v515 = vld [vmem:[#allocation7 + $0xdc] sm:$0xf]
    %v516 = vld [vmem:[#allocation7 + $0xe0] sm:$0xf]
    %v517 = vld [vmem:[#allocation7 + $0xe4] sm:$0xf]
    %v518 = vld [vmem:[#allocation7 + $0xe8] sm:$0xf]
    %v519 = vld [vmem:[#allocation7 + $0xec] sm:$0xf]
    %v520 = vld [vmem:[#allocation7 + $0xf0] sm:$0xf]
    %v521 = vld [vmem:[#allocation7 + $0xf4] sm:$0xf]
    %v522 = vld [vmem:[#allocation7 + $0xf8] sm:$0xf]
    %v523 = vld [vmem:[#allocation7 + $0xfc] sm:$0xf]
    %v524 = vld [vmem:[%s5 + $0x1] sm:$0x1]
    %v525 = vlaneseq
    %v526 = vshrl.u32 %v525, 7
    %v527 = vsub.s32 0, %v526
    %v528 = vrot.slane %v524, %v527
    %v593 = vunpack.c.l.b16 %v460
    %v594 = vunpack.c.l.b16 %v461
    %v595 = vunpack.c.l.b16 %v462
    %v596 = vunpack.c.l.b16 %v463
    %v597 = vunpack.c.l.b16 %v464
    %v598 = vunpack.c.l.b16 %v465
    %v599 = vunpack.c.l.b16 %v466
    %v600 = vunpack.c.l.b16 %v467
    %v601 = vunpack.c.l.b16 %v468
    %v602 = vunpack.c.l.b16 %v469
    %v603 = vunpack.c.l.b16 %v470
    %v604 = vunpack.c.l.b16 %v471
    %v605 = vunpack.c.l.b16 %v472
    %v606 = vunpack.c.l.b16 %v473
    %v607 = vunpack.c.l.b16 %v474
    %v608 = vunpack.c.l.b16 %v475
    %v609 = vunpack.c.l.b16 %v476
    %v610 = vunpack.c.l.b16 %v477
    %v611 = vunpack.c.l.b16 %v478
    %v612 = vunpack.c.l.b16 %v479
    %v613 = vunpack.c.l.b16 %v480
    %v614 = vunpack.c.l.b16 %v481
    %v615 = vunpack.c.l.b16 %v482
    %v616 = vunpack.c.l.b16 %v483
    %v617 = vunpack.c.l.b16 %v484
    %v618 = vunpack.c.l.b16 %v485
    %v619 = vunpack.c.l.b16 %v486
    %v620 = vunpack.c.l.b16 %v487
    %v621 = vunpack.c.l.b16 %v488
    %v622 = vunpack.c.l.b16 %v489
    %v623 = vunpack.c.l.b16 %v490
    %v624 = vunpack.c.l.b16 %v491
    %v625 = vunpack.c.l.b16 %v492
    %v626 = vunpack.c.l.b16 %v493
    %v627 = vunpack.c.l.b16 %v494
    %v628 = vunpack.c.l.b16 %v495
    %v629 = vunpack.c.l.b16 %v496
    %v630 = vunpack.c.l.b16 %v497
    %v631 = vunpack.c.l.b16 %v498
    %v632 = vunpack.c.l.b16 %v499
    %v633 = vunpack.c.l.b16 %v500
    %v634 = vunpack.c.l.b16 %v501
    %v635 = vunpack.c.l.b16 %v502
    %v636 = vunpack.c.l.b16 %v503
    %v637 = vunpack.c.l.b16 %v504
    %v638 = vunpack.c.l.b16 %v505
    %v639 = vunpack.c.l.b16 %v506
    %v640 = vunpack.c.l.b16 %v507
    %v641 = vunpack.c.l.b16 %v508
    %v642 = vunpack.c.l.b16 %v509
    %v643 = vunpack.c.l.b16 %v510
    %v644 = vunpack.c.l.b16 %v511
    %v645 = vunpack.c.l.b16 %v512
    %v646 = vunpack.c.l.b16 %v513
    %v647 = vunpack.c.l.b16 %v514
    %v648 = vunpack.c.l.b16 %v515
    %v649 = vunpack.c.l.b16 %v516
    %v650 = vunpack.c.l.b16 %v517
    %v651 = vunpack.c.l.b16 %v518
    %v652 = vunpack.c.l.b16 %v519
    %v653 = vunpack.c.l.b16 %v520
    %v654 = vunpack.c.l.b16 %v521
    %v655 = vunpack.c.l.b16 %v522
    %v656 = vunpack.c.l.b16 %v523
    %v657 = vpack.c.b16 %v594, %v593
    %v658 = vpack.c.b16 %v596, %v595
    %v659 = vpack.c.b16 %v598, %v597
    %v660 = vpack.c.b16 %v600, %v599
    %v661 = vpack.c.b16 %v602, %v601
    %v662 = vpack.c.b16 %v604, %v603
    %v663 = vpack.c.b16 %v606, %v605
    %v664 = vpack.c.b16 %v608, %v607
    %v665 = vpack.c.b16 %v610, %v609
    %v666 = vpack.c.b16 %v612, %v611
    %v667 = vpack.c.b16 %v614, %v613
    %v668 = vpack.c.b16 %v616, %v615
    %v669 = vpack.c.b16 %v618, %v617
    %v670 = vpack.c.b16 %v620, %v619
    %v671 = vpack.c.b16 %v622, %v621
    %v672 = vpack.c.b16 %v624, %v623
    %v673 = vpack.c.b16 %v626, %v625
    %v674 = vpack.c.b16 %v628, %v627
    %v675 = vpack.c.b16 %v630, %v629
    %v676 = vpack.c.b16 %v632, %v631
    %v677 = vpack.c.b16 %v634, %v633
    %v678 = vpack.c.b16 %v636, %v635
    %v679 = vpack.c.b16 %v638, %v637
    %v680 = vpack.c.b16 %v640, %v639
    %v681 = vpack.c.b16 %v642, %v641
    %v682 = vpack.c.b16 %v644, %v643
    %v683 = vpack.c.b16 %v646, %v645
    %v684 = vpack.c.b16 %v648, %v647
    %v685 = vpack.c.b16 %v650, %v649
    %v686 = vpack.c.b16 %v652, %v651
    %v687 = vpack.c.b16 %v654, %v653
    %v688 = vpack.c.b16 %v656, %v655
    %721 = vmatprep.subr.bf16.mxu0 0
    %722 = vmatpush1.bf16.msra.mxu0 %v657
    %723 = vmatprep.subr.bf16.mxu0 0
    %724 = vmatpush1.bf16.msra.mxu0 %v658
    %725 = vmatprep.subr.bf16.mxu0 0
    %726 = vmatpush1.bf16.msra.mxu0 %v659
    %727 = vmatprep.subr.bf16.mxu0 0
    %728 = vmatpush1.bf16.msra.mxu0 %v660
    %729 = vmatprep.subr.bf16.mxu0 0
    %730 = vmatpush1.bf16.msra.mxu0 %v661
    %731 = vmatprep.subr.bf16.mxu0 0
    %732 = vmatpush1.bf16.msra.mxu0 %v662
    %733 = vmatprep.subr.bf16.mxu0 0
    %734 = vmatpush1.bf16.msra.mxu0 %v663
    %735 = vmatprep.subr.bf16.mxu0 0
    %736 = vmatpush1.bf16.msra.mxu0 %v664
    %737 = vmatprep.subr.bf16.mxu0 0
    %738 = vmatpush1.bf16.msra.mxu0 %v665
    %739 = vmatprep.subr.bf16.mxu0 0
    %740 = vmatpush1.bf16.msra.mxu0 %v666
    %741 = vmatprep.subr.bf16.mxu0 0
    %742 = vmatpush1.bf16.msra.mxu0 %v667
    %743 = vmatprep.subr.bf16.mxu0 0
    %744 = vmatpush1.bf16.msra.mxu0 %v668
    %745 = vmatprep.subr.bf16.mxu0 0
    %746 = vmatpush1.bf16.msra.mxu0 %v669
    %747 = vmatprep.subr.bf16.mxu0 0
    %748 = vmatpush1.bf16.msra.mxu0 %v670
    %749 = vmatprep.subr.bf16.mxu0 0
    %750 = vmatpush1.bf16.msra.mxu0 %v671
    %751 = vmatprep.subr.bf16.mxu0 0
    %752 = vmatpush1.bf16.msra.mxu0 %v672
    %753 = vmatprep.mubr.bf16.mxu0 %v457
    %754 = vmatmul.mubr.bf16.gmra.mrb[0].mxu0 %v456
    %v755 = vpop.f32.mrb[0].mxu0
    %v756 = vadd.f32 %v528, %v755
    %v757 = vpop.f32.mrb[0].mxu0
    %v758 = vpop.f32.mrb[0].mxu0
    %v759 = vpop.f32.mrb[0].mxu0
    %760 = vdwg.mxu0
    %761 = vmatprep.subr.bf16.mxu0 0
    %762 = vmatpush1.bf16.msra.mxu0 %v673
    %763 = vmatprep.subr.bf16.mxu0 0
    %764 = vmatpush1.bf16.msra.mxu0 %v674
    %765 = vmatprep.subr.bf16.mxu0 0
    %766 = vmatpush1.bf16.msra.mxu0 %v675
    %767 = vmatprep.subr.bf16.mxu0 0
    %768 = vmatpush1.bf16.msra.mxu0 %v676
    %769 = vmatprep.subr.bf16.mxu0 0
    %770 = vmatpush1.bf16.msra.mxu0 %v677
    %771 = vmatprep.subr.bf16.mxu0 0
    %772 = vmatpush1.bf16.msra.mxu0 %v678
    %773 = vmatprep.subr.bf16.mxu0 0
    %774 = vmatpush1.bf16.msra.mxu0 %v679
    %775 = vmatprep.subr.bf16.mxu0 0
    %776 = vmatpush1.bf16.msra.mxu0 %v680
    %777 = vmatprep.subr.bf16.mxu0 0
    %778 = vmatpush1.bf16.msra.mxu0 %v681
    %779 = vmatprep.subr.bf16.mxu0 0
    %780 = vmatpush1.bf16.msra.mxu0 %v682
    %781 = vmatprep.subr.bf16.mxu0 0
    %782 = vmatpush1.bf16.msra.mxu0 %v683
    %783 = vmatprep.subr.bf16.mxu0 0
    %784 = vmatpush1.bf16.msra.mxu0 %v684
    %785 = vmatprep.subr.bf16.mxu0 0
    %786 = vmatpush1.bf16.msra.mxu0 %v685
    %787 = vmatprep.subr.bf16.mxu0 0
    %788 = vmatpush1.bf16.msra.mxu0 %v686
    %789 = vmatprep.subr.bf16.mxu0 0
    %790 = vmatpush1.bf16.msra.mxu0 %v687
    %791 = vmatprep.subr.bf16.mxu0 0
    %792 = vmatpush1.bf16.msra.mxu0 %v688
    %793 = vmatprep.mubr.bf16.mxu0 %v459
    %794 = vmatmul.mubr.bf16.gmra.mrb[0].mxu0 %v458
    %v795 = vpop.f32.mrb[0].mxu0
    %v796 = vadd.f32 %v756, %v795
    %v797 = vpop.f32.mrb[0].mxu0
    %v798 = vpop.f32.mrb[0].mxu0
    %v799 = vpop.f32.mrb[0].mxu0
    %800 = vdwg.mxu0
    %v801 = vadd.f32 %v150, %v796
    %v802 = vpack.c.bf16 %v801, %v801
    %s803 = scalar_lea.vmem [#allocation6], 256
    %v804 = vld [vmem:[%s803] sm:$0xff]
    %v805 = vld [vmem:[%s803 + $0x8] sm:$0xff]
    %v806 = vld [vmem:[%s803 + $0x10] sm:$0xff]
    %v807 = vld [vmem:[%s803 + $0x18] sm:$0xff]
    %v808 = vld [vmem:[%s803 + $0x20] sm:$0xff]
    %v809 = vld [vmem:[%s803 + $0x28] sm:$0xff]
    %v810 = vld [vmem:[%s803 + $0x30] sm:$0xff]
    %v811 = vld [vmem:[%s803 + $0x38] sm:$0xff]
    %v812 = vld [vmem:[%s803 + $0x40] sm:$0xff]
    %v813 = vld [vmem:[%s803 + $0x48] sm:$0xff]
    %v814 = vld [vmem:[%s803 + $0x50] sm:$0xff]
    %v815 = vld [vmem:[%s803 + $0x58] sm:$0xff]
    %v816 = vld [vmem:[%s803 + $0x60] sm:$0xff]
    %v817 = vld [vmem:[%s803 + $0x68] sm:$0xff]
    %v818 = vld [vmem:[%s803 + $0x70] sm:$0xff]
    %v819 = vld [vmem:[%s803 + $0x78] sm:$0xff]
    %v820 = vld [vmem:[%s803 + $0x80] sm:$0xff]
    %v821 = vld [vmem:[%s803 + $0x88] sm:$0xff]
    %v822 = vld [vmem:[%s803 + $0x90] sm:$0xff]
    %v823 = vld [vmem:[%s803 + $0x98] sm:$0xff]
    %v824 = vld [vmem:[%s803 + $0xa0] sm:$0xff]
    %v825 = vld [vmem:[%s803 + $0xa8] sm:$0xff]
    %v826 = vld [vmem:[%s803 + $0xb0] sm:$0xff]
    %v827 = vld [vmem:[%s803 + $0xb8] sm:$0xff]
    %v828 = vld [vmem:[%s803 + $0xc0] sm:$0xff]
    %v829 = vld [vmem:[%s803 + $0xc8] sm:$0xff]
    %v830 = vld [vmem:[%s803 + $0xd0] sm:$0xff]
    %v831 = vld [vmem:[%s803 + $0xd8] sm:$0xff]
    %v832 = vld [vmem:[%s803 + $0xe0] sm:$0xff]
    %v833 = vld [vmem:[%s803 + $0xe8] sm:$0xff]
    %v834 = vld [vmem:[%s803 + $0xf0] sm:$0xff]
    %v835 = vld [vmem:[%s803 + $0xf8] sm:$0xff]
    %s836 = scalar_lea.vmem [#allocation9], 1
    %v837 = vld [vmem:[%s836] ss:$4 sm:$0xf]
    %v839 = vlaneseq
    %v840 = vshrl.u32 %v839, 7
    %v841 = vsub.s32 0, %v840
    %v842 = vrot.slane %v837, %v841
    %v843 = vlaneseq
    %v844 = vshrl.u32 %v843, 7
    %v845 = vsub.s32 1, %v844
    %v846 = vrot.slane %v837, %v845
    %v847 = vlaneseq
    %v848 = vshrl.u32 %v847, 7
    %v849 = vsub.s32 2, %v848
    %v850 = vrot.slane %v837, %v849
    %v851 = vlaneseq
    %v852 = vshrl.u32 %v851, 7
    %v853 = vsub.s32 3, %v852
    %v854 = vrot.slane %v837, %v853
    %v891 = vunpack.c.l.b16 %v804
    %v892 = vunpack.c.h.b16 %v804
    %v893 = vunpack.c.l.b16 %v805
    %v894 = vunpack.c.h.b16 %v805
    %v895 = vunpack.c.l.b16 %v806
    %v896 = vunpack.c.h.b16 %v806
    %v897 = vunpack.c.l.b16 %v807
    %v898 = vunpack.c.h.b16 %v807
    %v899 = vunpack.c.l.b16 %v808
    %v900 = vunpack.c.h.b16 %v808
    %v901 = vunpack.c.l.b16 %v809
    %v902 = vunpack.c.h.b16 %v809
    %v903 = vunpack.c.l.b16 %v810
    %v904 = vunpack.c.h.b16 %v810
    %v905 = vunpack.c.l.b16 %v811
    %v906 = vunpack.c.h.b16 %v811
    %v907 = vunpack.c.l.b16 %v812
    %v908 = vunpack.c.h.b16 %v812
    %v909 = vunpack.c.l.b16 %v813
    %v910 = vunpack.c.h.b16 %v813
    %v911 = vunpack.c.l.b16 %v814
    %v912 = vunpack.c.h.b16 %v814
    %v913 = vunpack.c.l.b16 %v815
    %v914 = vunpack.c.h.b16 %v815
    %v915 = vunpack.c.l.b16 %v816
    %v916 = vunpack.c.h.b16 %v816
    %v917 = vunpack.c.l.b16 %v817
    %v918 = vunpack.c.h.b16 %v817
    %v919 = vunpack.c.l.b16 %v818
    %v920 = vunpack.c.h.b16 %v818
    %v921 = vunpack.c.l.b16 %v819
    %v922 = vunpack.c.h.b16 %v819
    %v923 = vunpack.c.l.b16 %v820
    %v924 = vunpack.c.h.b16 %v820
    %v925 = vunpack.c.l.b16 %v821
    %v926 = vunpack.c.h.b16 %v821
    %v927 = vunpack.c.l.b16 %v822
    %v928 = vunpack.c.h.b16 %v822
    %v929 = vunpack.c.l.b16 %v823
    %v930 = vunpack.c.h.b16 %v823
    %v931 = vunpack.c.l.b16 %v824
    %v932 = vunpack.c.h.b16 %v824
    %v933 = vunpack.c.l.b16 %v825
    %v934 = vunpack.c.h.b16 %v825
    %v935 = vunpack.c.l.b16 %v826
    %v936 = vunpack.c.h.b16 %v826
    %v937 = vunpack.c.l.b16 %v827
    %v938 = vunpack.c.h.b16 %v827
    %v939 = vunpack.c.l.b16 %v828
    %v940 = vunpack.c.h.b16 %v828
    %v941 = vunpack.c.l.b16 %v829
    %v942 = vunpack.c.h.b16 %v829
    %v943 = vunpack.c.l.b16 %v830
    %v944 = vunpack.c.h.b16 %v830
    %v945 = vunpack.c.l.b16 %v831
    %v946 = vunpack.c.h.b16 %v831
    %v947 = vunpack.c.l.b16 %v832
    %v948 = vunpack.c.h.b16 %v832
    %v949 = vunpack.c.l.b16 %v833
    %v950 = vunpack.c.h.b16 %v833
    %v951 = vunpack.c.l.b16 %v834
    %v952 = vunpack.c.h.b16 %v834
    %v953 = vunpack.c.l.b16 %v835
    %v954 = vunpack.c.h.b16 %v835
    %v955 = vpack.c.b16 %v895, %v891
    %v956 = vpack.c.b16 %v896, %v892
    %v957 = vpack.c.b16 %v897, %v893
    %v958 = vpack.c.b16 %v898, %v894
    %v959 = vpack.c.b16 %v903, %v899
    %v960 = vpack.c.b16 %v904, %v900
    %v961 = vpack.c.b16 %v905, %v901
    %v962 = vpack.c.b16 %v906, %v902
    %v963 = vpack.c.b16 %v911, %v907
    %v964 = vpack.c.b16 %v912, %v908
    %v965 = vpack.c.b16 %v913, %v909
    %v966 = vpack.c.b16 %v914, %v910
    %v967 = vpack.c.b16 %v919, %v915
    %v968 = vpack.c.b16 %v920, %v916
    %v969 = vpack.c.b16 %v921, %v917
    %v970 = vpack.c.b16 %v922, %v918
    %v971 = vpack.c.b16 %v927, %v923
    %v972 = vpack.c.b16 %v928, %v924
    %v973 = vpack.c.b16 %v929, %v925
    %v974 = vpack.c.b16 %v930, %v926
    %v975 = vpack.c.b16 %v935, %v931
    %v976 = vpack.c.b16 %v936, %v932
    %v977 = vpack.c.b16 %v937, %v933
    %v978 = vpack.c.b16 %v938, %v934
    %v979 = vpack.c.b16 %v943, %v939
    %v980 = vpack.c.b16 %v944, %v940
    %v981 = vpack.c.b16 %v945, %v941
    %v982 = vpack.c.b16 %v946, %v942
    %v983 = vpack.c.b16 %v951, %v947
    %v984 = vpack.c.b16 %v952, %v948
    %v985 = vpack.c.b16 %v953, %v949
    %v986 = vpack.c.b16 %v954, %v950
    %1019 = vmatprep.subr.bf16.mxu0 %v956
    %1020 = vmatpush1.bf16.msra.mxu0 %v955
    %1021 = vmatprep.subr.bf16.mxu0 %v960
    %1022 = vmatpush1.bf16.msra.mxu0 %v959
    %1023 = vmatprep.subr.bf16.mxu0 %v964
    %1024 = vmatpush1.bf16.msra.mxu0 %v963
    %1025 = vmatprep.subr.bf16.mxu0 %v968
    %1026 = vmatpush1.bf16.msra.mxu0 %v967
    %1027 = vmatprep.subr.bf16.mxu0 %v972
    %1028 = vmatpush1.bf16.msra.mxu0 %v971
    %1029 = vmatprep.subr.bf16.mxu0 %v976
    %1030 = vmatpush1.bf16.msra.mxu0 %v975
    %1031 = vmatprep.subr.bf16.mxu0 %v980
    %1032 = vmatpush1.bf16.msra.mxu0 %v979
    %1033 = vmatprep.subr.bf16.mxu0 %v984
    %1034 = vmatpush1.bf16.msra.mxu0 %v983
    %1035 = vmatprep.subr.bf16.mxu0 0
    %1036 = vmatpush1.bf16.msra.mxu0 0
    %1037 = vmatprep.subr.bf16.mxu0 0
    %1038 = vmatpush1.bf16.msra.mxu0 0
    %1039 = vmatprep.subr.bf16.mxu0 0
    %1040 = vmatpush1.bf16.msra.mxu0 0
    %1041 = vmatprep.subr.bf16.mxu0 0
    %1042 = vmatpush1.bf16.msra.mxu0 0
    %1043 = vmatprep.subr.bf16.mxu0 0
    %1044 = vmatpush1.bf16.msra.mxu0 0
    %1045 = vmatprep.subr.bf16.mxu0 0
    %1046 = vmatpush1.bf16.msra.mxu0 0
    %1047 = vmatprep.subr.bf16.mxu0 0
    %1048 = vmatpush1.bf16.msra.mxu0 0
    %1049 = vmatprep.subr.bf16.mxu0 0
    %1050 = vmatpush1.bf16.msra.mxu0 0
    %1051 = vmatprep.mubr.bf16.mxu0 0
    %1052 = vmatmul.mubr.bf16.gmra.mrb[0].mxu0 %v802
    %v1053 = vpop.f32.mrb[0].mxu0
    %v1054 = vadd.f32 %v842, %v1053
    %v1055 = vpop.f32.mrb[0].mxu0
    %v1056 = vadd.f32 %v846, %v1055
    %v1057 = vpop.f32.mrb[0].mxu0
    %v1058 = vpop.f32.mrb[0].mxu0
    %1059 = vdwg.mxu0
    %1060 = vmatprep.subr.bf16.mxu0 %v958
    %1061 = vmatpush1.bf16.msra.mxu0 %v957
    %1062 = vmatprep.subr.bf16.mxu0 %v962
    %1063 = vmatpush1.bf16.msra.mxu0 %v961
    %1064 = vmatprep.subr.bf16.mxu0 %v966
    %1065 = vmatpush1.bf16.msra.mxu0 %v965
    %1066 = vmatprep.subr.bf16.mxu0 %v970
    %1067 = vmatpush1.bf16.msra.mxu0 %v969
    %1068 = vmatprep.subr.bf16.mxu0 %v974
    %1069 = vmatpush1.bf16.msra.mxu0 %v973
    %1070 = vmatprep.subr.bf16.mxu0 %v978
    %1071 = vmatpush1.bf16.msra.mxu0 %v977
    %1072 = vmatprep.subr.bf16.mxu0 %v982
    %1073 = vmatpush1.bf16.msra.mxu0 %v981
    %1074 = vmatprep.subr.bf16.mxu0 %v986
    %1075 = vmatpush1.bf16.msra.mxu0 %v985
    %1076 = vmatprep.subr.bf16.mxu0 0
    %1077 = vmatpush1.bf16.msra.mxu0 0
    %1078 = vmatprep.subr.bf16.mxu0 0
    %1079 = vmatpush1.bf16.msra.mxu0 0
    %1080 = vmatprep.subr.bf16.mxu0 0
    %1081 = vmatpush1.bf16.msra.mxu0 0
    %1082 = vmatprep.subr.bf16.mxu0 0
    %1083 = vmatpush1.bf16.msra.mxu0 0
    %1084 = vmatprep.subr.bf16.mxu0 0
    %1085 = vmatpush1.bf16.msra.mxu0 0
    %1086 = vmatprep.subr.bf16.mxu0 0
    %1087 = vmatpush1.bf16.msra.mxu0 0
    %1088 = vmatprep.subr.bf16.mxu0 0
    %1089 = vmatpush1.bf16.msra.mxu0 0
    %1090 = vmatprep.subr.bf16.mxu0 0
    %1091 = vmatpush1.bf16.msra.mxu0 0
    %1092 = vmatprep.mubr.bf16.mxu0 0
    %1093 = vmatmul.mubr.bf16.gmra.mrb[0].mxu0 %v802
    %v1094 = vpop.f32.mrb[0].mxu0
    %v1095 = vadd.f32 %v850, %v1094
    %v1096 = vpop.f32.mrb[0].mxu0
    %v1097 = vadd.f32 %v854, %v1096
    %v1098 = vpop.f32.mrb[0].mxu0
    %v1099 = vpop.f32.mrb[0].mxu0
    %1100 = vdwg.mxu0
    %v1101 = vmax.f32 %v1054, 0.0
    %v1102 = vmax.f32 %v1056, 0.0
    %v1103 = vmax.f32 %v1095, 0.0
    %v1104 = vmax.f32 %v1097, 0.0
    %v1105 = vpack.c.bf16 %v1101, %v1101
    %v1106 = vpack.c.bf16 %v1102, %v1102
    %v1107 = vpack.c.bf16 %v1103, %v1103
    %v1108 = vpack.c.bf16 %v1104, %v1104
    %s1109 = scalar_lea.vmem [#allocation7], 256
    %v1110 = vld [vmem:[%s1109] sm:$0xf]
    %v1111 = vld [vmem:[%s1109 + $0x4] sm:$0xf]
    %v1112 = vld [vmem:[%s1109 + $0x8] sm:$0xf]
    %v1113 = vld [vmem:[%s1109 + $0xc] sm:$0xf]
    %v1114 = vld [vmem:[%s1109 + $0x10] sm:$0xf]
    %v1115 = vld [vmem:[%s1109 + $0x14] sm:$0xf]
    %v1116 = vld [vmem:[%s1109 + $0x18] sm:$0xf]
    %v1117 = vld [vmem:[%s1109 + $0x1c] sm:$0xf]
    %v1118 = vld [vmem:[%s1109 + $0x20] sm:$0xf]
    %v1119 = vld [vmem:[%s1109 + $0x24] sm:$0xf]
    %v1120 = vld [vmem:[%s1109 + $0x28] sm:$0xf]
    %v1121 = vld [vmem:[%s1109 + $0x2c] sm:$0xf]
    %v1122 = vld [vmem:[%s1109 + $0x30] sm:$0xf]
    %v1123 = vld [vmem:[%s1109 + $0x34] sm:$0xf]
    %v1124 = vld [vmem:[%s1109 + $0x38] sm:$0xf]
    %v1125 = vld [vmem:[%s1109 + $0x3c] sm:$0xf]
    %v1126 = vld [vmem:[%s1109 + $0x40] sm:$0xf]
    %v1127 = vld [vmem:[%s1109 + $0x44] sm:$0xf]
    %v1128 = vld [vmem:[%s1109 + $0x48] sm:$0xf]
    %v1129 = vld [vmem:[%s1109 + $0x4c] sm:$0xf]
    %v1130 = vld [vmem:[%s1109 + $0x50] sm:$0xf]
    %v1131 = vld [vmem:[%s1109 + $0x54] sm:$0xf]
    %v1132 = vld [vmem:[%s1109 + $0x58] sm:$0xf]
    %v1133 = vld [vmem:[%s1109 + $0x5c] sm:$0xf]
    %v1134 = vld [vmem:[%s1109 + $0x60] sm:$0xf]
    %v1135 = vld [vmem:[%s1109 + $0x64] sm:$0xf]
    %v1136 = vld [vmem:[%s1109 + $0x68] sm:$0xf]
    %v1137 = vld [vmem:[%s1109 + $0x6c] sm:$0xf]
    %v1138 = vld [vmem:[%s1109 + $0x70] sm:$0xf]
    %v1139 = vld [vmem:[%s1109 + $0x74] sm:$0xf]
    %v1140 = vld [vmem:[%s1109 + $0x78] sm:$0xf]
    %v1141 = vld [vmem:[%s1109 + $0x7c] sm:$0xf]
    %v1142 = vld [vmem:[%s1109 + $0x80] sm:$0xf]
    %v1143 = vld [vmem:[%s1109 + $0x84] sm:$0xf]
    %v1144 = vld [vmem:[%s1109 + $0x88] sm:$0xf]
    %v1145 = vld [vmem:[%s1109 + $0x8c] sm:$0xf]
    %v1146 = vld [vmem:[%s1109 + $0x90] sm:$0xf]
    %v1147 = vld [vmem:[%s1109 + $0x94] sm:$0xf]
    %v1148 = vld [vmem:[%s1109 + $0x98] sm:$0xf]
    %v1149 = vld [vmem:[%s1109 + $0x9c] sm:$0xf]
    %v1150 = vld [vmem:[%s1109 + $0xa0] sm:$0xf]
    %v1151 = vld [vmem:[%s1109 + $0xa4] sm:$0xf]
    %v1152 = vld [vmem:[%s1109 + $0xa8] sm:$0xf]
    %v1153 = vld [vmem:[%s1109 + $0xac] sm:$0xf]
    %v1154 = vld [vmem:[%s1109 + $0xb0] sm:$0xf]
    %v1155 = vld [vmem:[%s1109 + $0xb4] sm:$0xf]
    %v1156 = vld [vmem:[%s1109 + $0xb8] sm:$0xf]
    %v1157 = vld [vmem:[%s1109 + $0xbc] sm:$0xf]
    %v1158 = vld [vmem:[%s1109 + $0xc0] sm:$0xf]
    %v1159 = vld [vmem:[%s1109 + $0xc4] sm:$0xf]
    %v1160 = vld [vmem:[%s1109 + $0xc8] sm:$0xf]
    %v1161 = vld [vmem:[%s1109 + $0xcc] sm:$0xf]
    %v1162 = vld [vmem:[%s1109 + $0xd0] sm:$0xf]
    %v1163 = vld [vmem:[%s1109 + $0xd4] sm:$0xf]
    %v1164 = vld [vmem:[%s1109 + $0xd8] sm:$0xf]
    %v1165 = vld [vmem:[%s1109 + $0xdc] sm:$0xf]
    %v1166 = vld [vmem:[%s1109 + $0xe0] sm:$0xf]
    %v1167 = vld [vmem:[%s1109 + $0xe4] sm:$0xf]
    %v1168 = vld [vmem:[%s1109 + $0xe8] sm:$0xf]
    %v1169 = vld [vmem:[%s1109 + $0xec] sm:$0xf]
    %v1170 = vld [vmem:[%s1109 + $0xf0] sm:$0xf]
    %v1171 = vld [vmem:[%s1109 + $0xf4] sm:$0xf]
    %v1172 = vld [vmem:[%s1109 + $0xf8] sm:$0xf]
    %v1173 = vld [vmem:[%s1109 + $0xfc] sm:$0xf]
    %v1174 = vld [vmem:[%s5 + $0x2] sm:$0x1]
    %v1175 = vlaneseq
    %v1176 = vshrl.u32 %v1175, 7
    %v1177 = vsub.s32 0, %v1176
    %v1178 = vrot.slane %v1174, %v1177
    %v1243 = vunpack.c.l.b16 %v1110
    %v1244 = vunpack.c.l.b16 %v1111
    %v1245 = vunpack.c.l.b16 %v1112
    %v1246 = vunpack.c.l.b16 %v1113
    %v1247 = vunpack.c.l.b16 %v1114
    %v1248 = vunpack.c.l.b16 %v1115
    %v1249 = vunpack.c.l.b16 %v1116
    %v1250 = vunpack.c.l.b16 %v1117
    %v1251 = vunpack.c.l.b16 %v1118
    %v1252 = vunpack.c.l.b16 %v1119
    %v1253 = vunpack.c.l.b16 %v1120
    %v1254 = vunpack.c.l.b16 %v1121
    %v1255 = vunpack.c.l.b16 %v1122
    %v1256 = vunpack.c.l.b16 %v1123
    %v1257 = vunpack.c.l.b16 %v1124
    %v1258 = vunpack.c.l.b16 %v1125
    %v1259 = vunpack.c.l.b16 %v1126
    %v1260 = vunpack.c.l.b16 %v1127
    %v1261 = vunpack.c.l.b16 %v1128
    %v1262 = vunpack.c.l.b16 %v1129
    %v1263 = vunpack.c.l.b16 %v1130
    %v1264 = vunpack.c.l.b16 %v1131
    %v1265 = vunpack.c.l.b16 %v1132
    %v1266 = vunpack.c.l.b16 %v1133
    %v1267 = vunpack.c.l.b16 %v1134
    %v1268 = vunpack.c.l.b16 %v1135
    %v1269 = vunpack.c.l.b16 %v1136
    %v1270 = vunpack.c.l.b16 %v1137
    %v1271 = vunpack.c.l.b16 %v1138
    %v1272 = vunpack.c.l.b16 %v1139
    %v1273 = vunpack.c.l.b16 %v1140
    %v1274 = vunpack.c.l.b16 %v1141
    %v1275 = vunpack.c.l.b16 %v1142
    %v1276 = vunpack.c.l.b16 %v1143
    %v1277 = vunpack.c.l.b16 %v1144
    %v1278 = vunpack.c.l.b16 %v1145
    %v1279 = vunpack.c.l.b16 %v1146
    %v1280 = vunpack.c.l.b16 %v1147
    %v1281 = vunpack.c.l.b16 %v1148
    %v1282 = vunpack.c.l.b16 %v1149
    %v1283 = vunpack.c.l.b16 %v1150
    %v1284 = vunpack.c.l.b16 %v1151
    %v1285 = vunpack.c.l.b16 %v1152
    %v1286 = vunpack.c.l.b16 %v1153
    %v1287 = vunpack.c.l.b16 %v1154
    %v1288 = vunpack.c.l.b16 %v1155
    %v1289 = vunpack.c.l.b16 %v1156
    %v1290 = vunpack.c.l.b16 %v1157
    %v1291 = vunpack.c.l.b16 %v1158
    %v1292 = vunpack.c.l.b16 %v1159
    %v1293 = vunpack.c.l.b16 %v1160
    %v1294 = vunpack.c.l.b16 %v1161
    %v1295 = vunpack.c.l.b16 %v1162
    %v1296 = vunpack.c.l.b16 %v1163
    %v1297 = vunpack.c.l.b16 %v1164
    %v1298 = vunpack.c.l.b16 %v1165
    %v1299 = vunpack.c.l.b16 %v1166
    %v1300 = vunpack.c.l.b16 %v1167
    %v1301 = vunpack.c.l.b16 %v1168
    %v1302 = vunpack.c.l.b16 %v1169
    %v1303 = vunpack.c.l.b16 %v1170
    %v1304 = vunpack.c.l.b16 %v1171
    %v1305 = vunpack.c.l.b16 %v1172
    %v1306 = vunpack.c.l.b16 %v1173
    %v1307 = vpack.c.b16 %v1244, %v1243
    %v1308 = vpack.c.b16 %v1246, %v1245
    %v1309 = vpack.c.b16 %v1248, %v1247
    %v1310 = vpack.c.b16 %v1250, %v1249
    %v1311 = vpack.c.b16 %v1252, %v1251
    %v1312 = vpack.c.b16 %v1254, %v1253
    %v1313 = vpack.c.b16 %v1256, %v1255
    %v1314 = vpack.c.b16 %v1258, %v1257
    %v1315 = vpack.c.b16 %v1260, %v1259
    %v1316 = vpack.c.b16 %v1262, %v1261
    %v1317 = vpack.c.b16 %v1264, %v1263
    %v1318 = vpack.c.b16 %v1266, %v1265
    %v1319 = vpack.c.b16 %v1268, %v1267
    %v1320 = vpack.c.b16 %v1270, %v1269
    %v1321 = vpack.c.b16 %v1272, %v1271
    %v1322 = vpack.c.b16 %v1274, %v1273
    %v1323 = vpack.c.b16 %v1276, %v1275
    %v1324 = vpack.c.b16 %v1278, %v1277
    %v1325 = vpack.c.b16 %v1280, %v1279
    %v1326 = vpack.c.b16 %v1282, %v1281
    %v1327 = vpack.c.b16 %v1284, %v1283
    %v1328 = vpack.c.b16 %v1286, %v1285
    %v1329 = vpack.c.b16 %v1288, %v1287
    %v1330 = vpack.c.b16 %v1290, %v1289
    %v1331 = vpack.c.b16 %v1292, %v1291
    %v1332 = vpack.c.b16 %v1294, %v1293
    %v1333 = vpack.c.b16 %v1296, %v1295
    %v1334 = vpack.c.b16 %v1298, %v1297
    %v1335 = vpack.c.b16 %v1300, %v1299
    %v1336 = vpack.c.b16 %v1302, %v1301
    %v1337 = vpack.c.b16 %v1304, %v1303
    %v1338 = vpack.c.b16 %v1306, %v1305
    %1371 = vmatprep.subr.bf16.mxu0 0
    %1372 = vmatpush1.bf16.msra.mxu0 %v1307
    %1373 = vmatprep.subr.bf16.mxu0 0
    %1374 = vmatpush1.bf16.msra.mxu0 %v1308
    %1375 = vmatprep.subr.bf16.mxu0 0
    %1376 = vmatpush1.bf16.msra.mxu0 %v1309
    %1377 = vmatprep.subr.bf16.mxu0 0
    %1378 = vmatpush1.bf16.msra.mxu0 %v1310
    %1379 = vmatprep.subr.bf16.mxu0 0
    %1380 = vmatpush1.bf16.msra.mxu0 %v1311
    %1381 = vmatprep.subr.bf16.mxu0 0
    %1382 = vmatpush1.bf16.msra.mxu0 %v1312
    %1383 = vmatprep.subr.bf16.mxu0 0
    %1384 = vmatpush1.bf16.msra.mxu0 %v1313
    %1385 = vmatprep.subr.bf16.mxu0 0
    %1386 = vmatpush1.bf16.msra.mxu0 %v1314
    %1387 = vmatprep.subr.bf16.mxu0 0
    %1388 = vmatpush1.bf16.msra.mxu0 %v1315
    %1389 = vmatprep.subr.bf16.mxu0 0
    %1390 = vmatpush1.bf16.msra.mxu0 %v1316
    %1391 = vmatprep.subr.bf16.mxu0 0
    %1392 = vmatpush1.bf16.msra.mxu0 %v1317
    %1393 = vmatprep.subr.bf16.mxu0 0
    %1394 = vmatpush1.bf16.msra.mxu0 %v1318
    %1395 = vmatprep.subr.bf16.mxu0 0
    %1396 = vmatpush1.bf16.msra.mxu0 %v1319
    %1397 = vmatprep.subr.bf16.mxu0 0
    %1398 = vmatpush1.bf16.msra.mxu0 %v1320
    %1399 = vmatprep.subr.bf16.mxu0 0
    %1400 = vmatpush1.bf16.msra.mxu0 %v1321
    %1401 = vmatprep.subr.bf16.mxu0 0
    %1402 = vmatpush1.bf16.msra.mxu0 %v1322
    %1403 = vmatprep.mubr.bf16.mxu0 %v1106
    %1404 = vmatmul.mubr.bf16.gmra.mrb[0].mxu0 %v1105
    %v1405 = vpop.f32.mrb[0].mxu0
    %v1406 = vadd.f32 %v1178, %v1405
    %v1407 = vpop.f32.mrb[0].mxu0
    %v1408 = vpop.f32.mrb[0].mxu0
    %v1409 = vpop.f32.mrb[0].mxu0
    %1410 = vdwg.mxu0
    %1411 = vmatprep.subr.bf16.mxu0 0
    %1412 = vmatpush1.bf16.msra.mxu0 %v1323
    %1413 = vmatprep.subr.bf16.mxu0 0
    %1414 = vmatpush1.bf16.msra.mxu0 %v1324
    %1415 = vmatprep.subr.bf16.mxu0 0
    %1416 = vmatpush1.bf16.msra.mxu0 %v1325
    %1417 = vmatprep.subr.bf16.mxu0 0
    %1418 = vmatpush1.bf16.msra.mxu0 %v1326
    %1419 = vmatprep.subr.bf16.mxu0 0
    %1420 = vmatpush1.bf16.msra.mxu0 %v1327
    %1421 = vmatprep.subr.bf16.mxu0 0
    %1422 = vmatpush1.bf16.msra.mxu0 %v1328
    %1423 = vmatprep.subr.bf16.mxu0 0
    %1424 = vmatpush1.bf16.msra.mxu0 %v1329
    %1425 = vmatprep.subr.bf16.mxu0 0
    %1426 = vmatpush1.bf16.msra.mxu0 %v1330
    %1427 = vmatprep.subr.bf16.mxu0 0
    %1428 = vmatpush1.bf16.msra.mxu0 %v1331
    %1429 = vmatprep.subr.bf16.mxu0 0
    %1430 = vmatpush1.bf16.msra.mxu0 %v1332
    %1431 = vmatprep.subr.bf16.mxu0 0
    %1432 = vmatpush1.bf16.msra.mxu0 %v1333
    %1433 = vmatprep.subr.bf16.mxu0 0
    %1434 = vmatpush1.bf16.msra.mxu0 %v1334
    %1435 = vmatprep.subr.bf16.mxu0 0
    %1436 = vmatpush1.bf16.msra.mxu0 %v1335
    %1437 = vmatprep.subr.bf16.mxu0 0
    %1438 = vmatpush1.bf16.msra.mxu0 %v1336
    %1439 = vmatprep.subr.bf16.mxu0 0
    %1440 = vmatpush1.bf16.msra.mxu0 %v1337
    %1441 = vmatprep.subr.bf16.mxu0 0
    %1442 = vmatpush1.bf16.msra.mxu0 %v1338
    %1443 = vmatprep.mubr.bf16.mxu0 %v1108
    %1444 = vmatmul.mubr.bf16.gmra.mrb[0].mxu0 %v1107
    %v1445 = vpop.f32.mrb[0].mxu0
    %v1446 = vadd.f32 %v1406, %v1445
    %v1447 = vpop.f32.mrb[0].mxu0
    %v1448 = vpop.f32.mrb[0].mxu0
    %v1449 = vpop.f32.mrb[0].mxu0
    %1450 = vdwg.mxu0
    %v1451 = vadd.f32 %v801, %v1446
    %v1452 = vpack.c.bf16 %v1451, %v1451
    %s1453 = scalar_lea.vmem [#allocation6], 512
    %v1454 = vld [vmem:[%s1453] sm:$0xff]
    %v1455 = vld [vmem:[%s1453 + $0x8] sm:$0xff]
    %v1456 = vld [vmem:[%s1453 + $0x10] sm:$0xff]
    %v1457 = vld [vmem:[%s1453 + $0x18] sm:$0xff]
    %v1458 = vld [vmem:[%s1453 + $0x20] sm:$0xff]
    %v1459 = vld [vmem:[%s1453 + $0x28] sm:$0xff]
    %v1460 = vld [vmem:[%s1453 + $0x30] sm:$0xff]
    %v1461 = vld [vmem:[%s1453 + $0x38] sm:$0xff]
    %v1462 = vld [vmem:[%s1453 + $0x40] sm:$0xff]
    %v1463 = vld [vmem:[%s1453 + $0x48] sm:$0xff]
    %v1464 = vld [vmem:[%s1453 + $0x50] sm:$0xff]
    %v1465 = vld [vmem:[%s1453 + $0x58] sm:$0xff]
    %v1466 = vld [vmem:[%s1453 + $0x60] sm:$0xff]
    %v1467 = vld [vmem:[%s1453 + $0x68] sm:$0xff]
    %v1468 = vld [vmem:[%s1453 + $0x70] sm:$0xff]
    %v1469 = vld [vmem:[%s1453 + $0x78] sm:$0xff]
    %v1470 = vld [vmem:[%s1453 + $0x80] sm:$0xff]
    %v1471 = vld [vmem:[%s1453 + $0x88] sm:$0xff]
    %v1472 = vld [vmem:[%s1453 + $0x90] sm:$0xff]
    %v1473 = vld [vmem:[%s1453 + $0x98] sm:$0xff]
    %v1474 = vld [vmem:[%s1453 + $0xa0] sm:$0xff]
    %v1475 = vld [vmem:[%s1453 + $0xa8] sm:$0xff]
    %v1476 = vld [vmem:[%s1453 + $0xb0] sm:$0xff]
    %v1477 = vld [vmem:[%s1453 + $0xb8] sm:$0xff]
    %v1478 = vld [vmem:[%s1453 + $0xc0] sm:$0xff]
    %v1479 = vld [vmem:[%s1453 + $0xc8] sm:$0xff]
    %v1480 = vld [vmem:[%s1453 + $0xd0] sm:$0xff]
    %v1481 = vld [vmem:[%s1453 + $0xd8] sm:$0xff]
    %v1482 = vld [vmem:[%s1453 + $0xe0] sm:$0xff]
    %v1483 = vld [vmem:[%s1453 + $0xe8] sm:$0xff]
    %v1484 = vld [vmem:[%s1453 + $0xf0] sm:$0xff]
    %v1485 = vld [vmem:[%s1453 + $0xf8] sm:$0xff]
    %s1486 = scalar_lea.vmem [#allocation9], 2
    %v1487 = vld [vmem:[%s1486] ss:$4 sm:$0xf]
    %v1489 = vlaneseq
    %v1490 = vshrl.u32 %v1489, 7
    %v1491 = vsub.s32 0, %v1490
    %v1492 = vrot.slane %v1487, %v1491
    %v1493 = vlaneseq
    %v1494 = vshrl.u32 %v1493, 7
    %v1495 = vsub.s32 1, %v1494
    %v1496 = vrot.slane %v1487, %v1495
    %v1497 = vlaneseq
    %v1498 = vshrl.u32 %v1497, 7
    %v1499 = vsub.s32 2, %v1498
    %v1500 = vrot.slane %v1487, %v1499
    %v1501 = vlaneseq
    %v1502 = vshrl.u32 %v1501, 7
    %v1503 = vsub.s32 3, %v1502
    %v1504 = vrot.slane %v1487, %v1503
    %v1541 = vunpack.c.l.b16 %v1454
    %v1542 = vunpack.c.h.b16 %v1454
    %v1543 = vunpack.c.l.b16 %v1455
    %v1544 = vunpack.c.h.b16 %v1455
    %v1545 = vunpack.c.l.b16 %v1456
    %v1546 = vunpack.c.h.b16 %v1456
    %v1547 = vunpack.c.l.b16 %v1457
    %v1548 = vunpack.c.h.b16 %v1457
    %v1549 = vunpack.c.l.b16 %v1458
    %v1550 = vunpack.c.h.b16 %v1458
    %v1551 = vunpack.c.l.b16 %v1459
    %v1552 = vunpack.c.h.b16 %v1459
    %v1553 = vunpack.c.l.b16 %v1460
    %v1554 = vunpack.c.h.b16 %v1460
    %v1555 = vunpack.c.l.b16 %v1461
    %v1556 = vunpack.c.h.b16 %v1461
    %v1557 = vunpack.c.l.b16 %v1462
    %v1558 = vunpack.c.h.b16 %v1462
    %v1559 = vunpack.c.l.b16 %v1463
    %v1560 = vunpack.c.h.b16 %v1463
    %v1561 = vunpack.c.l.b16 %v1464
    %v1562 = vunpack.c.h.b16 %v1464
    %v1563 = vunpack.c.l.b16 %v1465
    %v1564 = vunpack.c.h.b16 %v1465
    %v1565 = vunpack.c.l.b16 %v1466
    %v1566 = vunpack.c.h.b16 %v1466
    %v1567 = vunpack.c.l.b16 %v1467
    %v1568 = vunpack.c.h.b16 %v1467
    %v1569 = vunpack.c.l.b16 %v1468
    %v1570 = vunpack.c.h.b16 %v1468
    %v1571 = vunpack.c.l.b16 %v1469
    %v1572 = vunpack.c.h.b16 %v1469
    %v1573 = vunpack.c.l.b16 %v1470
    %v1574 = vunpack.c.h.b16 %v1470
    %v1575 = vunpack.c.l.b16 %v1471
    %v1576 = vunpack.c.h.b16 %v1471
    %v1577 = vunpack.c.l.b16 %v1472
    %v1578 = vunpack.c.h.b16 %v1472
    %v1579 = vunpack.c.l.b16 %v1473
    %v1580 = vunpack.c.h.b16 %v1473
    %v1581 = vunpack.c.l.b16 %v1474
    %v1582 = vunpack.c.h.b16 %v1474
    %v1583 = vunpack.c.l.b16 %v1475
    %v1584 = vunpack.c.h.b16 %v1475
    %v1585 = vunpack.c.l.b16 %v1476
    %v1586 = vunpack.c.h.b16 %v1476
    %v1587 = vunpack.c.l.b16 %v1477
    %v1588 = vunpack.c.h.b16 %v1477
    %v1589 = vunpack.c.l.b16 %v1478
    %v1590 = vunpack.c.h.b16 %v1478
    %v1591 = vunpack.c.l.b16 %v1479
    %v1592 = vunpack.c.h.b16 %v1479
    %v1593 = vunpack.c.l.b16 %v1480
    %v1594 = vunpack.c.h.b16 %v1480
    %v1595 = vunpack.c.l.b16 %v1481
    %v1596 = vunpack.c.h.b16 %v1481
    %v1597 = vunpack.c.l.b16 %v1482
    %v1598 = vunpack.c.h.b16 %v1482
    %v1599 = vunpack.c.l.b16 %v1483
    %v1600 = vunpack.c.h.b16 %v1483
    %v1601 = vunpack.c.l.b16 %v1484
    %v1602 = vunpack.c.h.b16 %v1484
    %v1603 = vunpack.c.l.b16 %v1485
    %v1604 = vunpack.c.h.b16 %v1485
    %v1605 = vpack.c.b16 %v1545, %v1541
    %v1606 = vpack.c.b16 %v1546, %v1542
    %v1607 = vpack.c.b16 %v1547, %v1543
    %v1608 = vpack.c.b16 %v1548, %v1544
    %v1609 = vpack.c.b16 %v1553, %v1549
    %v1610 = vpack.c.b16 %v1554, %v1550
    %v1611 = vpack.c.b16 %v1555, %v1551
    %v1612 = vpack.c.b16 %v1556, %v1552
    %v1613 = vpack.c.b16 %v1561, %v1557
    %v1614 = vpack.c.b16 %v1562, %v1558
    %v1615 = vpack.c.b16 %v1563, %v1559
    %v1616 = vpack.c.b16 %v1564, %v1560
    %v1617 = vpack.c.b16 %v1569, %v1565
    %v1618 = vpack.c.b16 %v1570, %v1566
    %v1619 = vpack.c.b16 %v1571, %v1567
    %v1620 = vpack.c.b16 %v1572, %v1568
    %v1621 = vpack.c.b16 %v1577, %v1573
    %v1622 = vpack.c.b16 %v1578, %v1574
    %v1623 = vpack.c.b16 %v1579, %v1575
    %v1624 = vpack.c.b16 %v1580, %v1576
    %v1625 = vpack.c.b16 %v1585, %v1581
    %v1626 = vpack.c.b16 %v1586, %v1582
    %v1627 = vpack.c.b16 %v1587, %v1583
    %v1628 = vpack.c.b16 %v1588, %v1584
    %v1629 = vpack.c.b16 %v1593, %v1589
    %v1630 = vpack.c.b16 %v1594, %v1590
    %v1631 = vpack.c.b16 %v1595, %v1591
    %v1632 = vpack.c.b16 %v1596, %v1592
    %v1633 = vpack.c.b16 %v1601, %v1597
    %v1634 = vpack.c.b16 %v1602, %v1598
    %v1635 = vpack.c.b16 %v1603, %v1599
    %v1636 = vpack.c.b16 %v1604, %v1600
    %1669 = vmatprep.subr.bf16.mxu0 %v1606
    %1670 = vmatpush1.bf16.msra.mxu0 %v1605
    %1671 = vmatprep.subr.bf16.mxu0 %v1610
    %1672 = vmatpush1.bf16.msra.mxu0 %v1609
    %1673 = vmatprep.subr.bf16.mxu0 %v1614
    %1674 = vmatpush1.bf16.msra.mxu0 %v1613
    %1675 = vmatprep.subr.bf16.mxu0 %v1618
    %1676 = vmatpush1.bf16.msra.mxu0 %v1617
    %1677 = vmatprep.subr.bf16.mxu0 %v1622
    %1678 = vmatpush1.bf16.msra.mxu0 %v1621
    %1679 = vmatprep.subr.bf16.mxu0 %v1626
    %1680 = vmatpush1.bf16.msra.mxu0 %v1625
    %1681 = vmatprep.subr.bf16.mxu0 %v1630
    %1682 = vmatpush1.bf16.msra.mxu0 %v1629
    %1683 = vmatprep.subr.bf16.mxu0 %v1634
    %1684 = vmatpush1.bf16.msra.mxu0 %v1633
    %1685 = vmatprep.subr.bf16.mxu0 0
    %1686 = vmatpush1.bf16.msra.mxu0 0
    %1687 = vmatprep.subr.bf16.mxu0 0
    %1688 = vmatpush1.bf16.msra.mxu0 0
    %1689 = vmatprep.subr.bf16.mxu0 0
    %1690 = vmatpush1.bf16.msra.mxu0 0
    %1691 = vmatprep.subr.bf16.mxu0 0
    %1692 = vmatpush1.bf16.msra.mxu0 0
    %1693 = vmatprep.subr.bf16.mxu0 0
    %1694 = vmatpush1.bf16.msra.mxu0 0
    %1695 = vmatprep.subr.bf16.mxu0 0
    %1696 = vmatpush1.bf16.msra.mxu0 0
    %1697 = vmatprep.subr.bf16.mxu0 0
    %1698 = vmatpush1.bf16.msra.mxu0 0
    %1699 = vmatprep.subr.bf16.mxu0 0
    %1700 = vmatpush1.bf16.msra.mxu0 0
    %1701 = vmatprep.mubr.bf16.mxu0 0
    %1702 = vmatmul.mubr.bf16.gmra.mrb[0].mxu0 %v1452
    %v1703 = vpop.f32.mrb[0].mxu0
    %v1704 = vadd.f32 %v1492, %v1703
    %v1705 = vpop.f32.mrb[0].mxu0
    %v1706 = vadd.f32 %v1496, %v1705
    %v1707 = vpop.f32.mrb[0].mxu0
    %v1708 = vpop.f32.mrb[0].mxu0
    %1709 = vdwg.mxu0
    %1710 = vmatprep.subr.bf16.mxu0 %v1608
    %1711 = vmatpush1.bf16.msra.mxu0 %v1607
    %1712 = vmatprep.subr.bf16.mxu0 %v1612
    %1713 = vmatpush1.bf16.msra.mxu0 %v1611
    %1714 = vmatprep.subr.bf16.mxu0 %v1616
    %1715 = vmatpush1.bf16.msra.mxu0 %v1615
    %1716 = vmatprep.subr.bf16.mxu0 %v1620
    %1717 = vmatpush1.bf16.msra.mxu0 %v1619
    %1718 = vmatprep.subr.bf16.mxu0 %v1624
    %1719 = vmatpush1.bf16.msra.mxu0 %v1623
    %1720 = vmatprep.subr.bf16.mxu0 %v1628
    %1721 = vmatpush1.bf16.msra.mxu0 %v1627
    %1722 = vmatprep.subr.bf16.mxu0 %v1632
    %1723 = vmatpush1.bf16.msra.mxu0 %v1631
    %1724 = vmatprep.subr.bf16.mxu0 %v1636
    %1725 = vmatpush1.bf16.msra.mxu0 %v1635
    %1726 = vmatprep.subr.bf16.mxu0 0
    %1727 = vmatpush1.bf16.msra.mxu0 0
    %1728 = vmatprep.subr.bf16.mxu0 0
    %1729 = vmatpush1.bf16.msra.mxu0 0
    %1730 = vmatprep.subr.bf16.mxu0 0
    %1731 = vmatpush1.bf16.msra.mxu0 0
    %1732 = vmatprep.subr.bf16.mxu0 0
    %1733 = vmatpush1.bf16.msra.mxu0 0
    %1734 = vmatprep.subr.bf16.mxu0 0
    %1735 = vmatpush1.bf16.msra.mxu0 0
    %1736 = vmatprep.subr.bf16.mxu0 0
    %1737 = vmatpush1.bf16.msra.mxu0 0
    %1738 = vmatprep.subr.bf16.mxu0 0
    %1739 = vmatpush1.bf16.msra.mxu0 0
    %1740 = vmatprep.subr.bf16.mxu0 0
    %1741 = vmatpush1.bf16.msra.mxu0 0
    %1742 = vmatprep.mubr.bf16.mxu0 0
    %1743 = vmatmul.mubr.bf16.gmra.mrb[0].mxu0 %v1452
    %v1744 = vpop.f32.mrb[0].mxu0
    %v1745 = vadd.f32 %v1500, %v1744
    %v1746 = vpop.f32.mrb[0].mxu0
    %v1747 = vadd.f32 %v1504, %v1746
    %v1748 = vpop.f32.mrb[0].mxu0
    %v1749 = vpop.f32.mrb[0].mxu0
    %1750 = vdwg.mxu0
    %v1751 = vmax.f32 %v1704, 0.0
    %v1752 = vmax.f32 %v1706, 0.0
    %v1753 = vmax.f32 %v1745, 0.0
    %v1754 = vmax.f32 %v1747, 0.0
    %v1755 = vpack.c.bf16 %v1751, %v1751
    %v1756 = vpack.c.bf16 %v1752, %v1752
    %v1757 = vpack.c.bf16 %v1753, %v1753
    %v1758 = vpack.c.bf16 %v1754, %v1754
    %s1759 = scalar_lea.vmem [#allocation7], 512
    %v1760 = vld [vmem:[%s1759] sm:$0xf]
    %v1761 = vld [vmem:[%s1759 + $0x4] sm:$0xf]
    %v1762 = vld [vmem:[%s1759 + $0x8] sm:$0xf]
    %v1763 = vld [vmem:[%s1759 + $0xc] sm:$0xf]
    %v1764 = vld [vmem:[%s1759 + $0x10] sm:$0xf]
    %v1765 = vld [vmem:[%s1759 + $0x14] sm:$0xf]
    %v1766 = vld [vmem:[%s1759 + $0x18] sm:$0xf]
    %v1767 = vld [vmem:[%s1759 + $0x1c] sm:$0xf]
    %v1768 = vld [vmem:[%s1759 + $0x20] sm:$0xf]
    %v1769 = vld [vmem:[%s1759 + $0x24] sm:$0xf]
    %v1770 = vld [vmem:[%s1759 + $0x28] sm:$0xf]
    %v1771 = vld [vmem:[%s1759 + $0x2c] sm:$0xf]
    %v1772 = vld [vmem:[%s1759 + $0x30] sm:$0xf]
    %v1773 = vld [vmem:[%s1759 + $0x34] sm:$0xf]
    %v1774 = vld [vmem:[%s1759 + $0x38] sm:$0xf]
    %v1775 = vld [vmem:[%s1759 + $0x3c] sm:$0xf]
    %v1776 = vld [vmem:[%s1759 + $0x40] sm:$0xf]
    %v1777 = vld [vmem:[%s1759 + $0x44] sm:$0xf]
    %v1778 = vld [vmem:[%s1759 + $0x48] sm:$0xf]
    %v1779 = vld [vmem:[%s1759 + $0x4c] sm:$0xf]
    %v1780 = vld [vmem:[%s1759 + $0x50] sm:$0xf]
    %v1781 = vld [vmem:[%s1759 + $0x54] sm:$0xf]
    %v1782 = vld [vmem:[%s1759 + $0x58] sm:$0xf]
    %v1783 = vld [vmem:[%s1759 + $0x5c] sm:$0xf]
    %v1784 = vld [vmem:[%s1759 + $0x60] sm:$0xf]
    %v1785 = vld [vmem:[%s1759 + $0x64] sm:$0xf]
    %v1786 = vld [vmem:[%s1759 + $0x68] sm:$0xf]
    %v1787 = vld [vmem:[%s1759 + $0x6c] sm:$0xf]
    %v1788 = vld [vmem:[%s1759 + $0x70] sm:$0xf]
    %v1789 = vld [vmem:[%s1759 + $0x74] sm:$0xf]
    %v1790 = vld [vmem:[%s1759 + $0x78] sm:$0xf]
    %v1791 = vld [vmem:[%s1759 + $0x7c] sm:$0xf]
    %v1792 = vld [vmem:[%s1759 + $0x80] sm:$0xf]
    %v1793 = vld [vmem:[%s1759 + $0x84] sm:$0xf]
    %v1794 = vld [vmem:[%s1759 + $0x88] sm:$0xf]
    %v1795 = vld [vmem:[%s1759 + $0x8c] sm:$0xf]
    %v1796 = vld [vmem:[%s1759 + $0x90] sm:$0xf]
    %v1797 = vld [vmem:[%s1759 + $0x94] sm:$0xf]
    %v1798 = vld [vmem:[%s1759 + $0x98] sm:$0xf]
    %v1799 = vld [vmem:[%s1759 + $0x9c] sm:$0xf]
    %v1800 = vld [vmem:[%s1759 + $0xa0] sm:$0xf]
    %v1801 = vld [vmem:[%s1759 + $0xa4] sm:$0xf]
    %v1802 = vld [vmem:[%s1759 + $0xa8] sm:$0xf]
    %v1803 = vld [vmem:[%s1759 + $0xac] sm:$0xf]
    %v1804 = vld [vmem:[%s1759 + $0xb0] sm:$0xf]
    %v1805 = vld [vmem:[%s1759 + $0xb4] sm:$0xf]
    %v1806 = vld [vmem:[%s1759 + $0xb8] sm:$0xf]
    %v1807 = vld [vmem:[%s1759 + $0xbc] sm:$0xf]
    %v1808 = vld [vmem:[%s1759 + $0xc0] sm:$0xf]
    %v1809 = vld [vmem:[%s1759 + $0xc4] sm:$0xf]
    %v1810 = vld [vmem:[%s1759 + $0xc8] sm:$0xf]
    %v1811 = vld [vmem:[%s1759 + $0xcc] sm:$0xf]
    %v1812 = vld [vmem:[%s1759 + $0xd0] sm:$0xf]
    %v1813 = vld [vmem:[%s1759 + $0xd4] sm:$0xf]
    %v1814 = vld [vmem:[%s1759 + $0xd8] sm:$0xf]
    %v1815 = vld [vmem:[%s1759 + $0xdc] sm:$0xf]
    %v1816 = vld [vmem:[%s1759 + $0xe0] sm:$0xf]
    %v1817 = vld [vmem:[%s1759 + $0xe4] sm:$0xf]
    %v1818 = vld [vmem:[%s1759 + $0xe8] sm:$0xf]
    %v1819 = vld [vmem:[%s1759 + $0xec] sm:$0xf]
    %v1820 = vld [vmem:[%s1759 + $0xf0] sm:$0xf]
    %v1821 = vld [vmem:[%s1759 + $0xf4] sm:$0xf]
    %v1822 = vld [vmem:[%s1759 + $0xf8] sm:$0xf]
    %v1823 = vld [vmem:[%s1759 + $0xfc] sm:$0xf]
    %v1824 = vld [vmem:[%s5 + $0x3] sm:$0x1]
    %v1825 = vlaneseq
    %v1826 = vshrl.u32 %v1825, 7
    %v1827 = vsub.s32 0, %v1826
    %v1828 = vrot.slane %v1824, %v1827
    %v1893 = vunpack.c.l.b16 %v1760
    %v1894 = vunpack.c.l.b16 %v1761
    %v1895 = vunpack.c.l.b16 %v1762
    %v1896 = vunpack.c.l.b16 %v1763
    %v1897 = vunpack.c.l.b16 %v1764
    %v1898 = vunpack.c.l.b16 %v1765
    %v1899 = vunpack.c.l.b16 %v1766
    %v1900 = vunpack.c.l.b16 %v1767
    %v1901 = vunpack.c.l.b16 %v1768
    %v1902 = vunpack.c.l.b16 %v1769
    %v1903 = vunpack.c.l.b16 %v1770
    %v1904 = vunpack.c.l.b16 %v1771
    %v1905 = vunpack.c.l.b16 %v1772
    %v1906 = vunpack.c.l.b16 %v1773
    %v1907 = vunpack.c.l.b16 %v1774
    %v1908 = vunpack.c.l.b16 %v1775
    %v1909 = vunpack.c.l.b16 %v1776
    %v1910 = vunpack.c.l.b16 %v1777
    %v1911 = vunpack.c.l.b16 %v1778
    %v1912 = vunpack.c.l.b16 %v1779
    %v1913 = vunpack.c.l.b16 %v1780
    %v1914 = vunpack.c.l.b16 %v1781
    %v1915 = vunpack.c.l.b16 %v1782
    %v1916 = vunpack.c.l.b16 %v1783
    %v1917 = vunpack.c.l.b16 %v1784
    %v1918 = vunpack.c.l.b16 %v1785
    %v1919 = vunpack.c.l.b16 %v1786
    %v1920 = vunpack.c.l.b16 %v1787
    %v1921 = vunpack.c.l.b16 %v1788
    %v1922 = vunpack.c.l.b16 %v1789
    %v1923 = vunpack.c.l.b16 %v1790
    %v1924 = vunpack.c.l.b16 %v1791
    %v1925 = vunpack.c.l.b16 %v1792
    %v1926 = vunpack.c.l.b16 %v1793
    %v1927 = vunpack.c.l.b16 %v1794
    %v1928 = vunpack.c.l.b16 %v1795
    %v1929 = vunpack.c.l.b16 %v1796
    %v1930 = vunpack.c.l.b16 %v1797
    %v1931 = vunpack.c.l.b16 %v1798
    %v1932 = vunpack.c.l.b16 %v1799
    %v1933 = vunpack.c.l.b16 %v1800
    %v1934 = vunpack.c.l.b16 %v1801
    %v1935 = vunpack.c.l.b16 %v1802
    %v1936 = vunpack.c.l.b16 %v1803
    %v1937 = vunpack.c.l.b16 %v1804
    %v1938 = vunpack.c.l.b16 %v1805
    %v1939 = vunpack.c.l.b16 %v1806
    %v1940 = vunpack.c.l.b16 %v1807
    %v1941 = vunpack.c.l.b16 %v1808
    %v1942 = vunpack.c.l.b16 %v1809
    %v1943 = vunpack.c.l.b16 %v1810
    %v1944 = vunpack.c.l.b16 %v1811
    %v1945 = vunpack.c.l.b16 %v1812
    %v1946 = vunpack.c.l.b16 %v1813
    %v1947 = vunpack.c.l.b16 %v1814
    %v1948 = vunpack.c.l.b16 %v1815
    %v1949 = vunpack.c.l.b16 %v1816
    %v1950 = vunpack.c.l.b16 %v1817
    %v1951 = vunpack.c.l.b16 %v1818
    %v1952 = vunpack.c.l.b16 %v1819
    %v1953 = vunpack.c.l.b16 %v1820
    %v1954 = vunpack.c.l.b16 %v1821
    %v1955 = vunpack.c.l.b16 %v1822
    %v1956 = vunpack.c.l.b16 %v1823
    %v1957 = vpack.c.b16 %v1894, %v1893
    %v1958 = vpack.c.b16 %v1896, %v1895
    %v1959 = vpack.c.b16 %v1898, %v1897
    %v1960 = vpack.c.b16 %v1900, %v1899
    %v1961 = vpack.c.b16 %v1902, %v1901
    %v1962 = vpack.c.b16 %v1904, %v1903
    %v1963 = vpack.c.b16 %v1906, %v1905
    %v1964 = vpack.c.b16 %v1908, %v1907
    %v1965 = vpack.c.b16 %v1910, %v1909
    %v1966 = vpack.c.b16 %v1912, %v1911
    %v1967 = vpack.c.b16 %v1914, %v1913
    %v1968 = vpack.c.b16 %v1916, %v1915
    %v1969 = vpack.c.b16 %v1918, %v1917
    %v1970 = vpack.c.b16 %v1920, %v1919
    %v1971 = vpack.c.b16 %v1922, %v1921
    %v1972 = vpack.c.b16 %v1924, %v1923
    %v1973 = vpack.c.b16 %v1926, %v1925
    %v1974 = vpack.c.b16 %v1928, %v1927
    %v1975 = vpack.c.b16 %v1930, %v1929
    %v1976 = vpack.c.b16 %v1932, %v1931
    %v1977 = vpack.c.b16 %v1934, %v1933
    %v1978 = vpack.c.b16 %v1936, %v1935
    %v1979 = vpack.c.b16 %v1938, %v1937
    %v1980 = vpack.c.b16 %v1940, %v1939
    %v1981 = vpack.c.b16 %v1942, %v1941
    %v1982 = vpack.c.b16 %v1944, %v1943
    %v1983 = vpack.c.b16 %v1946, %v1945
    %v1984 = vpack.c.b16 %v1948, %v1947
    %v1985 = vpack.c.b16 %v1950, %v1949
    %v1986 = vpack.c.b16 %v1952, %v1951
    %v1987 = vpack.c.b16 %v1954, %v1953
    %v1988 = vpack.c.b16 %v1956, %v1955
    %2021 = vmatprep.subr.bf16.mxu0 0
    %2022 = vmatpush1.bf16.msra.mxu0 %v1957
    %2023 = vmatprep.subr.bf16.mxu0 0
    %2024 = vmatpush1.bf16.msra.mxu0 %v1958
    %2025 = vmatprep.subr.bf16.mxu0 0
    %2026 = vmatpush1.bf16.msra.mxu0 %v1959
    %2027 = vmatprep.subr.bf16.mxu0 0
    %2028 = vmatpush1.bf16.msra.mxu0 %v1960
    %2029 = vmatprep.subr.bf16.mxu0 0
    %2030 = vmatpush1.bf16.msra.mxu0 %v1961
    %2031 = vmatprep.subr.bf16.mxu0 0
    %2032 = vmatpush1.bf16.msra.mxu0 %v1962
    %2033 = vmatprep.subr.bf16.mxu0 0
    %2034 = vmatpush1.bf16.msra.mxu0 %v1963
    %2035 = vmatprep.subr.bf16.mxu0 0
    %2036 = vmatpush1.bf16.msra.mxu0 %v1964
    %2037 = vmatprep.subr.bf16.mxu0 0
    %2038 = vmatpush1.bf16.msra.mxu0 %v1965
    %2039 = vmatprep.subr.bf16.mxu0 0
    %2040 = vmatpush1.bf16.msra.mxu0 %v1966
    %2041 = vmatprep.subr.bf16.mxu0 0
    %2042 = vmatpush1.bf16.msra.mxu0 %v1967
    %2043 = vmatprep.subr.bf16.mxu0 0
    %2044 = vmatpush1.bf16.msra.mxu0 %v1968
    %2045 = vmatprep.subr.bf16.mxu0 0
    %2046 = vmatpush1.bf16.msra.mxu0 %v1969
    %2047 = vmatprep.subr.bf16.mxu0 0
    %2048 = vmatpush1.bf16.msra.mxu0 %v1970
    %2049 = vmatprep.subr.bf16.mxu0 0
    %2050 = vmatpush1.bf16.msra.mxu0 %v1971
    %2051 = vmatprep.subr.bf16.mxu0 0
    %2052 = vmatpush1.bf16.msra.mxu0 %v1972
    %2053 = vmatprep.mubr.bf16.mxu0 %v1756
    %2054 = vmatmul.mubr.bf16.gmra.mrb[0].mxu0 %v1755
    %v2055 = vpop.f32.mrb[0].mxu0
    %v2056 = vadd.f32 %v1828, %v2055
    %v2057 = vpop.f32.mrb[0].mxu0
    %v2058 = vpop.f32.mrb[0].mxu0
    %v2059 = vpop.f32.mrb[0].mxu0
    %2060 = vdwg.mxu0
    %2061 = vmatprep.subr.bf16.mxu0 0
    %2062 = vmatpush1.bf16.msra.mxu0 %v1973
    %2063 = vmatprep.subr.bf16.mxu0 0
    %2064 = vmatpush1.bf16.msra.mxu0 %v1974
    %2065 = vmatprep.subr.bf16.mxu0 0
    %2066 = vmatpush1.bf16.msra.mxu0 %v1975
    %2067 = vmatprep.subr.bf16.mxu0 0
    %2068 = vmatpush1.bf16.msra.mxu0 %v1976
    %2069 = vmatprep.subr.bf16.mxu0 0
    %2070 = vmatpush1.bf16.msra.mxu0 %v1977
    %2071 = vmatprep.subr.bf16.mxu0 0
    %2072 = vmatpush1.bf16.msra.mxu0 %v1978
    %2073 = vmatprep.subr.bf16.mxu0 0
    %2074 = vmatpush1.bf16.msra.mxu0 %v1979
    %2075 = vmatprep.subr.bf16.mxu0 0
    %2076 = vmatpush1.bf16.msra.mxu0 %v1980
    %2077 = vmatprep.subr.bf16.mxu0 0
    %2078 = vmatpush1.bf16.msra.mxu0 %v1981
    %2079 = vmatprep.subr.bf16.mxu0 0
    %2080 = vmatpush1.bf16.msra.mxu0 %v1982
    %2081 = vmatprep.subr.bf16.mxu0 0
    %2082 = vmatpush1.bf16.msra.mxu0 %v1983
    %2083 = vmatprep.subr.bf16.mxu0 0
    %2084 = vmatpush1.bf16.msra.mxu0 %v1984
    %2085 = vmatprep.subr.bf16.mxu0 0
    %2086 = vmatpush1.bf16.msra.mxu0 %v1985
    %2087 = vmatprep.subr.bf16.mxu0 0
    %2088 = vmatpush1.bf16.msra.mxu0 %v1986
    %2089 = vmatprep.subr.bf16.mxu0 0
    %2090 = vmatpush1.bf16.msra.mxu0 %v1987
    %2091 = vmatprep.subr.bf16.mxu0 0
    %2092 = vmatpush1.bf16.msra.mxu0 %v1988
    %2093 = vmatprep.mubr.bf16.mxu0 %v1758
    %2094 = vmatmul.mubr.bf16.gmra.mrb[0].mxu0 %v1757
    %v2095 = vpop.f32.mrb[0].mxu0
    %v2096 = vadd.f32 %v2056, %v2095
    %v2097 = vpop.f32.mrb[0].mxu0
    %v2098 = vpop.f32.mrb[0].mxu0
    %v2099 = vpop.f32.mrb[0].mxu0
    %2100 = vdwg.mxu0
    %v2101 = vadd.f32 %v1451, %v2096
    %v2102 = vld [vmem:[%s5 + $0x4] sm:$0x1]
    %v2103 = vld [vmem:[%s5 + $0x5] sm:$0x1]
    %v2104 = vlaneseq
    %v2105 = vshrl.u32 %v2104, 7
    %v2106 = vsub.s32 0, %v2105
    %v2107 = vrot.slane %v2102, %v2106
    %v2108 = vmul.f32 %v2101, %v2107
    %2109 = vadd.xlane.f32.xlu0 %v2108
    %v2110 = vpop.xlane.xlu0 %2109
    %v2111 = vlaneseq
    %v2112 = vshrl.u32 %v2111, 7
    %v2113 = vsub.s32 0, %v2112
    %v2114 = vrot.slane %v2103, %v2113
    %v2115 = vadd.f32 %v2110, %v2114
    %v2116 = vxor.u32 %v2115, 2147483648
    %v2117 = vmul.f32 %v2116, 1.442695
    %v2118 = vpow.pop %v2117
    %v2119 = vadd.f32 %v2118, 1.0
    %v2120 = vrcp.pop %v2119
    %v2121 = vmul.f32 1.0, %v2120
    %vm2122 = vcmask 7168
    %2123 = vst.msk [vmem:[%s6] sm:$0xff] %vm2122, %v2121
    // Predicated region
    $region46: #{tpu_custom_call.1} parent=1 // pred_check
      _
    $region47: #{tpu_custom_call.1} parent=1 // pred_check_branch
      %2125 = sbr.rel (0) target = $region49
    $region48: #{tpu_custom_call.1} parent=1 // pred_region
      _
    $region49: #{tpu_custom_call.1} parent=1 // pred_fallthru
      _
    // Predicated region
    $region50: #{tpu_custom_call.1} parent=1 // pred_check
      _
    $region51: #{tpu_custom_call.1} parent=1 // pred_check_branch
      %2127 = sbr.rel (0) target = $region53
    $region52: #{tpu_custom_call.1} parent=1 // pred_region
      _
    $region53: #{tpu_custom_call.1} parent=1 // pred_fallthru
      _
    %2128 = vsyncpa [#allocation3], 1
    %2129 = vsyncpa [#allocation5], 1
    %2130 = vsyncpa [#allocation8], 1

</llo_original>
